<compile_context>
chip_gen: v7x
topology: tpu7x:2x2x1
jax: 0.10.0
libtpu: 0.0.40
codegen_flags: <defaults>
</compile_context>

<pallas_src>
import numpy as np
import jax
import jax.numpy as jnp
from jax.experimental import pallas as pl
from jax.experimental.pallas import tpu as pltpu

KERNEL_SIZE = 11
SIGMA = 1.5
DATA_RANGE = 1.0
K1, K2 = 0.01, 0.03
ALPHA = 0.1
MAX_IMAGES_PER_STEP = 16   # bounds the unrolled per-image loop (compile time)


def _gaussian_1d(kernel_size=KERNEL_SIZE, sigma=SIGMA):
    # Matches torchmetrics _gaussian(): arange((1-k)/2, (1+k)/2), exp(-(d/s)^2/2), normalized.
    dist = np.arange((1 - kernel_size) / 2.0, (1 + kernel_size) / 2.0, 1.0, dtype=np.float64)
    gauss = np.exp(-((dist / sigma) ** 2) / 2.0)
    return gauss / gauss.sum()


def _banded_matrices(h, w):
    """Banded gaussian matrices so the separable 'valid' conv becomes two matmuls."""
    g = _gaussian_1d()
    K = KERNEL_SIZE
    hv, wv = h - K + 1, w - K + 1
    gw = np.zeros((w, wv), np.float32)        # W pass:  (..., w) @ (w, wv)
    for j in range(wv):
        gw[j:j + K, j] = g
    gh = np.zeros((hv, h), np.float32)        # H pass:  (hv, h) @ (h, ...)
    for i in range(hv):
        gh[i, i:i + K] = g
    return gw, gh


def _vmem_capacity_bytes():
    try:
        return int(pltpu.get_tpu_info().vmem_capacity_bytes)
    except Exception:
        return 64 * 1024 * 1024   # conservative fallback (v7x-sized VMEM)


def _choose_tile(bc, h, w, in_itemsize):
    """Images per grid step + VMEM budget, generation-aware."""
    K = KERNEL_SIZE
    hv, wv = h - K + 1, w - K + 1
    budget = (_vmem_capacity_bytes() * 3) // 4     # ~48 MiB v7x, ~96 MiB v5e/v6e

    # Resident gaussian operands; the pipeline double-buffers them even though
    # their index_map is constant (see TODO about pl.Buffered(1)).
    fixed = 2 * (w * wv + hv * h) * 4
    # Per-image f32 working set of the unrolled loop: casts (2 maps), 5 maps,
    # W-pass output (5*h*wv), smoothed maps + SSIM temporaries (~8*hv*wv).
    work = (7 * h * w + 5 * h * wv + 8 * hv * wv) * 4
    # Double-buffered input pair streamed per image (native dtype in HBM).
    stream = 2 * 2 * h * w * in_itemsize

    nb = (budget - fixed - work) // max(stream, 1)
    nb = max(1, min(bc, int(nb), MAX_IMAGES_PER_STEP))
    if bc >= 2:                 # v7x: keep >= 2 grid steps so both TCs get work
        nb = min(nb, bc // 2)
    nb = max(nb, 1)
    while bc % nb:
        nb -= 1
    return nb, int(budget)


def make_combined_loss_kernel(nb, h, w):
    K = KERNEL_SIZE
    hv, wv = h - K + 1, w - K + 1
    c1 = (K1 * DATA_RANGE) ** 2
    c2 = (K2 * DATA_RANGE) ** 2

    def kernel(x_ref, y_ref, gw_ref, gh_ref, out_ref):
        # Gaussian operands loaded once per grid step; gh stays the stationary
        # LHS of every H-pass matmul (no broadcast, no batched einsum).
        gw = gw_ref[...]                              # (w, wv)  f32
        gh = gh_ref[...]                              # (hv, h)  f32

        sse = jnp.float32(0.0)
        ssim_sum = jnp.float32(0.0)

        # Unrolled loop over the images of this tile: keeps the f32 working set
        # at one image and yields per-image partial sums (bounded drift).
        for n in range(nb):
            xi = x_ref[n].astype(jnp.float32)         # (h, w), cast in VMEM
            yi = y_ref[n].astype(jnp.float32)

            # ---- partial sum of squared error (MSE numerator) ----
            d = xi - yi
            sse = sse + jnp.sum(d * d)

            # ---- five maps stacked along rows; W pass = one 2-D MXU matmul ----
            maps = jnp.concatenate([xi, yi, xi * xi, yi * yi, xi * yi], axis=0)  # (5h, w)
            t = jnp.dot(maps, gw, preferred_element_type=jnp.float32)            # (5h, wv)

            # ---- H pass: 2-D matmuls against the single resident gh ----
            mu_x = jnp.dot(gh, t[0 * h:1 * h], preferred_element_type=jnp.float32)
            mu_y = jnp.dot(gh, t[1 * h:2 * h], preferred_element_type=jnp.float32)
            exx  = jnp.dot(gh, t[2 * h:3 * h], preferred_element_type=jnp.float32)
            eyy  = jnp.dot(gh, t[3 * h:4 * h], preferred_element_type=jnp.float32)
            exy  = jnp.dot(gh, t[4 * h:5 * h], preferred_element_type=jnp.float32)

            sxx = exx - mu_x * mu_x
            syy = eyy - mu_y * mu_y
            sxy = exy - mu_x * mu_y

            # ---- SSIM map fused with its reduction (exact divide for tolerance) ----
            num = (2.0 * mu_x * mu_y + c1) * (2.0 * sxy + c2)
            den = (mu_x * mu_x + mu_y * mu_y + c1) * (sxx + syy + c2)
            ssim_sum = ssim_sum + jnp.sum(num / den)

        # ---- lane-dense partial sums, written directly (no concat/reshape) ----
        out_ref[0:1, 0:1, :] = jnp.full((1, 1, 128), sse, jnp.float32)
        out_ref[0:1, 1:2, :] = jnp.full((1, 1, 128), ssim_sum, jnp.float32)

    return kernel


def combined_loss(denoised, target, alpha=ALPHA):
    """denoised, target: (B, C, H, W) arrays in [0, 1]. Returns f32 scalar loss."""
    b, c, h, w = denoised.shape
    K = KERNEL_SIZE
    assert h >= K and w >= K, "spatial dims must be >= 11 for SSIM"
    bc = b * c
    hv, wv = h - K + 1, w - K + 1

    # Free reshape only; NO dtype cast here (cast happens per-image in the kernel).
    x3 = denoised.reshape(bc, h, w)
    y3 = target.reshape(bc, h, w)
    gw_np, gh_np = _banded_matrices(h, w)
    gw = jnp.asarray(gw_np)
    gh = jnp.asarray(gh_np)

    nb, vmem_budget = _choose_tile(bc, h, w, denoised.dtype.itemsize)
    num_tiles = bc // nb
    kernel = make_combined_loss_kernel(nb, h, w)

    flops = int(2 * 5 * bc * h * w * wv          # W-pass matmuls
                + 2 * 5 * bc * hv * h * wv       # H-pass matmuls
                + 30 * bc * hv * wv              # SSIM map + reduction
                + 6 * bc * h * w)                # map construction + MSE
    bytes_accessed = int(2 * bc * h * w * denoised.dtype.itemsize
                         + (w * wv + hv * h) * 4
                         + num_tiles * 2 * 128 * 4)

    partials = pl.pallas_call(
        kernel,
        grid=(num_tiles,),
        out_shape=jax.ShapeDtypeStruct((num_tiles, 2, 128), jnp.float32),
        in_specs=[
            pl.BlockSpec((nb, h, w), lambda i: (i, 0, 0)),
            pl.BlockSpec((nb, h, w), lambda i: (i, 0, 0)),
            pl.BlockSpec((w, wv), lambda i: (0, 0)),
            pl.BlockSpec((hv, h), lambda i: (0, 0)),
        ],
        out_specs=pl.BlockSpec((1, 2, 128), lambda i: (i, 0, 0)),
        compiler_params=pltpu.CompilerParams(
            dimension_semantics=("parallel",),
            vmem_limit_bytes=vmem_budget,
        ),
        cost_estimate=pl.CostEstimate(
            flops=flops, transcendentals=0, bytes_accessed=bytes_accessed),
    )(x3, y3, gw, gh)

    sse_total = jnp.sum(partials[:, 0, 0])
    ssim_total = jnp.sum(partials[:, 1, 0])
    mse = sse_total / (bc * h * w)
    ssim = ssim_total / (bc * hv * wv)
    return mse + alpha * (1.0 - ssim)


def _reference_loss_numpy(x, y, alpha=ALPHA):
    """Pure-numpy reference with identical semantics (float64)."""
    x = np.asarray(x, np.float64)
    y = np.asarray(y, np.float64)
    b, c, h, w = x.shape
    g = _gaussian_1d()
    K = KERNEL_SIZE
    hv, wv = h - K + 1, w - K + 1

    mse = np.mean((x - y) ** 2)

    def smooth(z):
        acc = np.zeros((b, c, h, wv))
        for k in range(K):
            acc += g[k] * z[:, :, :, k:k + wv]
        acc2 = np.zeros((b, c, hv, wv))
        for k in range(K):
            acc2 += g[k] * acc[:, :, k:k + hv, :]
        return acc2

    mu_x, mu_y = smooth(x), smooth(y)
    sxx = smooth(x * x) - mu_x ** 2
    syy = smooth(y * y) - mu_y ** 2
    sxy = smooth(x * y) - mu_x * mu_y
    c1 = (K1 * DATA_RANGE) ** 2
    c2 = (K2 * DATA_RANGE) ** 2
    ssim_map = ((2 * mu_x * mu_y + c1) * (2 * sxy + c2)) / ((mu_x ** 2 + mu_y ** 2 + c1) * (sxx + syy + c2))
    ssim = ssim_map.mean()
    return mse + alpha * (1.0 - ssim)


if __name__ == "__main__":
    key = jax.random.PRNGKey(0)
    k1, k2 = jax.random.split(key)
    B, C, H, W = 2, 4, 16, 16
    # Images in [0, 1] (data_range=1.0); target = clean-ish, denoised = noisy version.
    target = jax.random.uniform(k1, (B, C, H, W), dtype=jnp.float32)
    denoised = jnp.clip(target + 0.05 * jax.random.normal(k2, (B, C, H, W), dtype=jnp.float32), 0.0, 1.0)

    loss = jax.jit(combined_loss)(denoised, target)
    loss = jax.block_until_ready(loss)

    ref = _reference_loss_numpy(np.asarray(denoised), np.asarray(target))
    # f32 MXU kernel vs f64 numpy reference.
    assert np.allclose(float(loss), float(ref), rtol=5e-4, atol=5e-5), (float(loss), float(ref))

    print("KERNEL_OK")
</pallas_src>

<mosaic_0001>
module attributes {stable_mosaic.version = 11 : i64} {
  func.func @kernel(%arg0: i32, %arg1: memref<4x16x16xf32, #tpu.memory_space<vmem>>, %arg2: memref<4x16x16xf32, #tpu.memory_space<vmem>>, %arg3: memref<16x6xf32, #tpu.memory_space<vmem>>, %arg4: memref<6x16xf32, #tpu.memory_space<vmem>>, %arg5: memref<1x2x128xf32, #tpu.memory_space<vmem>>) attributes {dimension_semantics = [#tpu.dimension_semantics<parallel>], iteration_bounds = array<i64: 2>, scalar_prefetch = 0 : i64, scratch_operands = 0 : i64, tpu.core_type = #tpu.core_type<tc>, window_params = [{transform_indices = @transform_0, window_bounds = array<i64: 4, 16, 16>}, {transform_indices = @transform_1, window_bounds = array<i64: 4, 16, 16>}, {pipeline_mode = #tpu.pipeline_mode<synchronous>, transform_indices = @transform_2, window_bounds = array<i64: 16, 6>}, {pipeline_mode = #tpu.pipeline_mode<synchronous>, transform_indices = @transform_3, window_bounds = array<i64: 6, 16>}, {transform_indices = @transform_4, window_bounds = array<i64: 1, 2, 128>}]} {
    %c0 = arith.constant 0 : index
    %c0_0 = arith.constant 0 : index
    %0 = vector.load %arg3[%c0, %c0_0] : memref<16x6xf32, #tpu.memory_space<vmem>>, vector<16x6xf32>
    %c0_1 = arith.constant 0 : index
    %c0_2 = arith.constant 0 : index
    %1 = vector.load %arg4[%c0_1, %c0_2] : memref<6x16xf32, #tpu.memory_space<vmem>>, vector<6x16xf32>
    %c0_3 = arith.constant 0 : index
    %c0_4 = arith.constant 0 : index
    %c0_5 = arith.constant 0 : index
    %2 = vector.load %arg1[%c0_3, %c0_4, %c0_5] : memref<4x16x16xf32, #tpu.memory_space<vmem>>, vector<1x16x16xf32>
    %3 = vector.shape_cast %2 : vector<1x16x16xf32> to vector<16x16xf32>
    %c0_6 = arith.constant 0 : index
    %c0_7 = arith.constant 0 : index
    %c0_8 = arith.constant 0 : index
    %4 = vector.load %arg2[%c0_6, %c0_7, %c0_8] : memref<4x16x16xf32, #tpu.memory_space<vmem>>, vector<1x16x16xf32>
    %5 = vector.shape_cast %4 : vector<1x16x16xf32> to vector<16x16xf32>
    %6 = arith.subf %3, %5 : vector<16x16xf32>
    %7 = arith.mulf %6, %6 : vector<16x16xf32>
    %8 = vector.shape_cast %7 : vector<16x16xf32> to vector<1x16x16xf32>
    %cst = arith.constant dense<0.000000e+00> : vector<1xf32>
    %9 = vector.multi_reduction <add>, %8, %cst [1, 2] : vector<1x16x16xf32> to vector<1xf32>
    %10 = vector.shape_cast %9 : vector<1xf32> to vector<1x1x1xf32>
    %11 = vector.extract %10[0, 0, 0] : f32 from vector<1x1x1xf32>
    %cst_9 = arith.constant 0.000000e+00 : f32
    %12 = arith.addf %cst_9, %11 : f32
    %13 = arith.mulf %3, %3 : vector<16x16xf32>
    %14 = arith.mulf %5, %5 : vector<16x16xf32>
    %15 = arith.mulf %3, %5 : vector<16x16xf32>
    %16 = tpu.concatenate %3, %5, %13, %14, %15 in 0 : vector<16x16xf32>, vector<16x16xf32>, vector<16x16xf32>, vector<16x16xf32>, vector<16x16xf32> -> vector<80x16xf32>
    %cst_10 = arith.constant dense<0.000000e+00> : vector<80x6xf32>
    %17 = tpu.matmul %16, %0, %cst_10 {dimension_numbers = #tpu.dot_dimension_numbers<[1], [0], [0], [1], [0, 0, 1, 1], [], []>} : vector<80x16xf32>, vector<16x6xf32>, vector<80x6xf32> -> vector<80x6xf32>
    %18 = vector.extract_strided_slice %17 {offsets = [0, 0], sizes = [16, 6], strides = [1, 1]} : vector<80x6xf32> to vector<16x6xf32>
    %cst_11 = arith.constant dense<0.000000e+00> : vector<6x6xf32>
    %19 = tpu.matmul %1, %18, %cst_11 {dimension_numbers = #tpu.dot_dimension_numbers<[1], [0], [0], [1], [0, 0, 1, 1], [], []>} : vector<6x16xf32>, vector<16x6xf32>, vector<6x6xf32> -> vector<6x6xf32>
    %20 = vector.extract_strided_slice %17 {offsets = [16, 0], sizes = [16, 6], strides = [1, 1]} : vector<80x6xf32> to vector<16x6xf32>
    %cst_12 = arith.constant dense<0.000000e+00> : vector<6x6xf32>
    %21 = tpu.matmul %1, %20, %cst_12 {dimension_numbers = #tpu.dot_dimension_numbers<[1], [0], [0], [1], [0, 0, 1, 1], [], []>} : vector<6x16xf32>, vector<16x6xf32>, vector<6x6xf32> -> vector<6x6xf32>
    %22 = vector.extract_strided_slice %17 {offsets = [32, 0], sizes = [16, 6], strides = [1, 1]} : vector<80x6xf32> to vector<16x6xf32>
    %cst_13 = arith.constant dense<0.000000e+00> : vector<6x6xf32>
    %23 = tpu.matmul %1, %22, %cst_13 {dimension_numbers = #tpu.dot_dimension_numbers<[1], [0], [0], [1], [0, 0, 1, 1], [], []>} : vector<6x16xf32>, vector<16x6xf32>, vector<6x6xf32> -> vector<6x6xf32>
    %24 = vector.extract_strided_slice %17 {offsets = [48, 0], sizes = [16, 6], strides = [1, 1]} : vector<80x6xf32> to vector<16x6xf32>
    %cst_14 = arith.constant dense<0.000000e+00> : vector<6x6xf32>
    %25 = tpu.matmul %1, %24, %cst_14 {dimension_numbers = #tpu.dot_dimension_numbers<[1], [0], [0], [1], [0, 0, 1, 1], [], []>} : vector<6x16xf32>, vector<16x6xf32>, vector<6x6xf32> -> vector<6x6xf32>
    %26 = vector.extract_strided_slice %17 {offsets = [64, 0], sizes = [16, 6], strides = [1, 1]} : vector<80x6xf32> to vector<16x6xf32>
    %cst_15 = arith.constant dense<0.000000e+00> : vector<6x6xf32>
    %27 = tpu.matmul %1, %26, %cst_15 {dimension_numbers = #tpu.dot_dimension_numbers<[1], [0], [0], [1], [0, 0, 1, 1], [], []>} : vector<6x16xf32>, vector<16x6xf32>, vector<6x6xf32> -> vector<6x6xf32>
    %28 = arith.mulf %19, %19 : vector<6x6xf32>
    %29 = arith.subf %23, %28 : vector<6x6xf32>
    %30 = arith.mulf %21, %21 : vector<6x6xf32>
    %31 = arith.subf %25, %30 : vector<6x6xf32>
    %32 = arith.mulf %19, %21 : vector<6x6xf32>
    %33 = arith.subf %27, %32 : vector<6x6xf32>
    %cst_16 = arith.constant 2.000000e+00 : f32
    %34 = vector.broadcast %cst_16 : f32 to vector<6x6xf32>
    %35 = arith.mulf %34, %19 : vector<6x6xf32>
    %36 = arith.mulf %35, %21 : vector<6x6xf32>
    %cst_17 = arith.constant 9.99999974E-5 : f32
    %37 = vector.broadcast %cst_17 : f32 to vector<6x6xf32>
    %38 = arith.addf %36, %37 : vector<6x6xf32>
    %cst_18 = arith.constant 2.000000e+00 : f32
    %39 = vector.broadcast %cst_18 : f32 to vector<6x6xf32>
    %40 = arith.mulf %39, %33 : vector<6x6xf32>
    %cst_19 = arith.constant 8.99999984E-4 : f32
    %41 = vector.broadcast %cst_19 : f32 to vector<6x6xf32>
    %42 = arith.addf %40, %41 : vector<6x6xf32>
    %43 = arith.mulf %38, %42 : vector<6x6xf32>
    %44 = arith.mulf %19, %19 : vector<6x6xf32>
    %45 = arith.mulf %21, %21 : vector<6x6xf32>
    %46 = arith.addf %44, %45 : vector<6x6xf32>
    %cst_20 = arith.constant 9.99999974E-5 : f32
    %47 = vector.broadcast %cst_20 : f32 to vector<6x6xf32>
    %48 = arith.addf %46, %47 : vector<6x6xf32>
    %49 = arith.addf %29, %31 : vector<6x6xf32>
    %cst_21 = arith.constant 8.99999984E-4 : f32
    %50 = vector.broadcast %cst_21 : f32 to vector<6x6xf32>
    %51 = arith.addf %49, %50 : vector<6x6xf32>
    %52 = arith.mulf %48, %51 : vector<6x6xf32>
    %53 = arith.divf %43, %52 : vector<6x6xf32>
    %54 = vector.shape_cast %53 : vector<6x6xf32> to vector<1x6x6xf32>
    %cst_22 = arith.constant dense<0.000000e+00> : vector<1xf32>
    %55 = vector.multi_reduction <add>, %54, %cst_22 [1, 2] : vector<1x6x6xf32> to vector<1xf32>
    %56 = vector.shape_cast %55 : vector<1xf32> to vector<1x1x1xf32>
    %57 = vector.extract %56[0, 0, 0] : f32 from vector<1x1x1xf32>
    %cst_23 = arith.constant 0.000000e+00 : f32
    %58 = arith.addf %cst_23, %57 : f32
    %c1 = arith.constant 1 : index
    %c0_24 = arith.constant 0 : index
    %c0_25 = arith.constant 0 : index
    %59 = vector.load %arg1[%c1, %c0_24, %c0_25] : memref<4x16x16xf32, #tpu.memory_space<vmem>>, vector<1x16x16xf32>
    %60 = vector.shape_cast %59 : vector<1x16x16xf32> to vector<16x16xf32>
    %c1_26 = arith.constant 1 : index
    %c0_27 = arith.constant 0 : index
    %c0_28 = arith.constant 0 : index
    %61 = vector.load %arg2[%c1_26, %c0_27, %c0_28] : memref<4x16x16xf32, #tpu.memory_space<vmem>>, vector<1x16x16xf32>
    %62 = vector.shape_cast %61 : vector<1x16x16xf32> to vector<16x16xf32>
    %63 = arith.subf %60, %62 : vector<16x16xf32>
    %64 = arith.mulf %63, %63 : vector<16x16xf32>
    %65 = vector.shape_cast %64 : vector<16x16xf32> to vector<1x16x16xf32>
    %cst_29 = arith.constant dense<0.000000e+00> : vector<1xf32>
    %66 = vector.multi_reduction <add>, %65, %cst_29 [1, 2] : vector<1x16x16xf32> to vector<1xf32>
    %67 = vector.shape_cast %66 : vector<1xf32> to vector<1x1x1xf32>
    %68 = vector.extract %67[0, 0, 0] : f32 from vector<1x1x1xf32>
    %69 = arith.addf %12, %68 : f32
    %70 = arith.mulf %60, %60 : vector<16x16xf32>
    %71 = arith.mulf %62, %62 : vector<16x16xf32>
    %72 = arith.mulf %60, %62 : vector<16x16xf32>
    %73 = tpu.concatenate %60, %62, %70, %71, %72 in 0 : vector<16x16xf32>, vector<16x16xf32>, vector<16x16xf32>, vector<16x16xf32>, vector<16x16xf32> -> vector<80x16xf32>
    %cst_30 = arith.constant dense<0.000000e+00> : vector<80x6xf32>
    %74 = tpu.matmul %73, %0, %cst_30 {dimension_numbers = #tpu.dot_dimension_numbers<[1], [0], [0], [1], [0, 0, 1, 1], [], []>} : vector<80x16xf32>, vector<16x6xf32>, vector<80x6xf32> -> vector<80x6xf32>
    %75 = vector.extract_strided_slice %74 {offsets = [0, 0], sizes = [16, 6], strides = [1, 1]} : vector<80x6xf32> to vector<16x6xf32>
    %cst_31 = arith.constant dense<0.000000e+00> : vector<6x6xf32>
    %76 = tpu.matmul %1, %75, %cst_31 {dimension_numbers = #tpu.dot_dimension_numbers<[1], [0], [0], [1], [0, 0, 1, 1], [], []>} : vector<6x16xf32>, vector<16x6xf32>, vector<6x6xf32> -> vector<6x6xf32>
    %77 = vector.extract_strided_slice %74 {offsets = [16, 0], sizes = [16, 6], strides = [1, 1]} : vector<80x6xf32> to vector<16x6xf32>
    %cst_32 = arith.constant dense<0.000000e+00> : vector<6x6xf32>
    %78 = tpu.matmul %1, %77, %cst_32 {dimension_numbers = #tpu.dot_dimension_numbers<[1], [0], [0], [1], [0, 0, 1, 1], [], []>} : vector<6x16xf32>, vector<16x6xf32>, vector<6x6xf32> -> vector<6x6xf32>
    %79 = vector.extract_strided_slice %74 {offsets = [32, 0], sizes = [16, 6], strides = [1, 1]} : vector<80x6xf32> to vector<16x6xf32>
    %cst_33 = arith.constant dense<0.000000e+00> : vector<6x6xf32>
    %80 = tpu.matmul %1, %79, %cst_33 {dimension_numbers = #tpu.dot_dimension_numbers<[1], [0], [0], [1], [0, 0, 1, 1], [], []>} : vector<6x16xf32>, vector<16x6xf32>, vector<6x6xf32> -> vector<6x6xf32>
    %81 = vector.extract_strided_slice %74 {offsets = [48, 0], sizes = [16, 6], strides = [1, 1]} : vector<80x6xf32> to vector<16x6xf32>
    %cst_34 = arith.constant dense<0.000000e+00> : vector<6x6xf32>
    %82 = tpu.matmul %1, %81, %cst_34 {dimension_numbers = #tpu.dot_dimension_numbers<[1], [0], [0], [1], [0, 0, 1, 1], [], []>} : vector<6x16xf32>, vector<16x6xf32>, vector<6x6xf32> -> vector<6x6xf32>
    %83 = vector.extract_strided_slice %74 {offsets = [64, 0], sizes = [16, 6], strides = [1, 1]} : vector<80x6xf32> to vector<16x6xf32>
    %cst_35 = arith.constant dense<0.000000e+00> : vector<6x6xf32>
    %84 = tpu.matmul %1, %83, %cst_35 {dimension_numbers = #tpu.dot_dimension_numbers<[1], [0], [0], [1], [0, 0, 1, 1], [], []>} : vector<6x16xf32>, vector<16x6xf32>, vector<6x6xf32> -> vector<6x6xf32>
    %85 = arith.mulf %76, %76 : vector<6x6xf32>
    %86 = arith.subf %80, %85 : vector<6x6xf32>
    %87 = arith.mulf %78, %78 : vector<6x6xf32>
    %88 = arith.subf %82, %87 : vector<6x6xf32>
    %89 = arith.mulf %76, %78 : vector<6x6xf32>
    %90 = arith.subf %84, %89 : vector<6x6xf32>
    %cst_36 = arith.constant 2.000000e+00 : f32
    %91 = vector.broadcast %cst_36 : f32 to vector<6x6xf32>
    %92 = arith.mulf %91, %76 : vector<6x6xf32>
    %93 = arith.mulf %92, %78 : vector<6x6xf32>
    %cst_37 = arith.constant 9.99999974E-5 : f32
    %94 = vector.broadcast %cst_37 : f32 to vector<6x6xf32>
    %95 = arith.addf %93, %94 : vector<6x6xf32>
    %cst_38 = arith.constant 2.000000e+00 : f32
    %96 = vector.broadcast %cst_38 : f32 to vector<6x6xf32>
    %97 = arith.mulf %96, %90 : vector<6x6xf32>
    %cst_39 = arith.constant 8.99999984E-4 : f32
    %98 = vector.broadcast %cst_39 : f32 to vector<6x6xf32>
    %99 = arith.addf %97, %98 : vector<6x6xf32>
    %100 = arith.mulf %95, %99 : vector<6x6xf32>
    %101 = arith.mulf %76, %76 : vector<6x6xf32>
    %102 = arith.mulf %78, %78 : vector<6x6xf32>
    %103 = arith.addf %101, %102 : vector<6x6xf32>
    %cst_40 = arith.constant 9.99999974E-5 : f32
    %104 = vector.broadcast %cst_40 : f32 to vector<6x6xf32>
    %105 = arith.addf %103, %104 : vector<6x6xf32>
    %106 = arith.addf %86, %88 : vector<6x6xf32>
    %cst_41 = arith.constant 8.99999984E-4 : f32
    %107 = vector.broadcast %cst_41 : f32 to vector<6x6xf32>
    %108 = arith.addf %106, %107 : vector<6x6xf32>
    %109 = arith.mulf %105, %108 : vector<6x6xf32>
    %110 = arith.divf %100, %109 : vector<6x6xf32>
    %111 = vector.shape_cast %110 : vector<6x6xf32> to vector<1x6x6xf32>
    %cst_42 = arith.constant dense<0.000000e+00> : vector<1xf32>
    %112 = vector.multi_reduction <add>, %111, %cst_42 [1, 2] : vector<1x6x6xf32> to vector<1xf32>
    %113 = vector.shape_cast %112 : vector<1xf32> to vector<1x1x1xf32>
    %114 = vector.extract %113[0, 0, 0] : f32 from vector<1x1x1xf32>
    %115 = arith.addf %58, %114 : f32
    %c2 = arith.constant 2 : index
    %c0_43 = arith.constant 0 : index
    %c0_44 = arith.constant 0 : index
    %116 = vector.load %arg1[%c2, %c0_43, %c0_44] : memref<4x16x16xf32, #tpu.memory_space<vmem>>, vector<1x16x16xf32>
    %117 = vector.shape_cast %116 : vector<1x16x16xf32> to vector<16x16xf32>
    %c2_45 = arith.constant 2 : index
    %c0_46 = arith.constant 0 : index
    %c0_47 = arith.constant 0 : index
    %118 = vector.load %arg2[%c2_45, %c0_46, %c0_47] : memref<4x16x16xf32, #tpu.memory_space<vmem>>, vector<1x16x16xf32>
    %119 = vector.shape_cast %118 : vector<1x16x16xf32> to vector<16x16xf32>
    %120 = arith.subf %117, %119 : vector<16x16xf32>
    %121 = arith.mulf %120, %120 : vector<16x16xf32>
    %122 = vector.shape_cast %121 : vector<16x16xf32> to vector<1x16x16xf32>
    %cst_48 = arith.constant dense<0.000000e+00> : vector<1xf32>
    %123 = vector.multi_reduction <add>, %122, %cst_48 [1, 2] : vector<1x16x16xf32> to vector<1xf32>
    %124 = vector.shape_cast %123 : vector<1xf32> to vector<1x1x1xf32>
    %125 = vector.extract %124[0, 0, 0] : f32 from vector<1x1x1xf32>
    %126 = arith.addf %69, %125 : f32
    %127 = arith.mulf %117, %117 : vector<16x16xf32>
    %128 = arith.mulf %119, %119 : vector<16x16xf32>
    %129 = arith.mulf %117, %119 : vector<16x16xf32>
    %130 = tpu.concatenate %117, %119, %127, %128, %129 in 0 : vector<16x16xf32>, vector<16x16xf32>, vector<16x16xf32>, vector<16x16xf32>, vector<16x16xf32> -> vector<80x16xf32>
    %cst_49 = arith.constant dense<0.000000e+00> : vector<80x6xf32>
    %131 = tpu.matmul %130, %0, %cst_49 {dimension_numbers = #tpu.dot_dimension_numbers<[1], [0], [0], [1], [0, 0, 1, 1], [], []>} : vector<80x16xf32>, vector<16x6xf32>, vector<80x6xf32> -> vector<80x6xf32>
    %132 = vector.extract_strided_slice %131 {offsets = [0, 0], sizes = [16, 6], strides = [1, 1]} : vector<80x6xf32> to vector<16x6xf32>
    %cst_50 = arith.constant dense<0.000000e+00> : vector<6x6xf32>
    %133 = tpu.matmul %1, %132, %cst_50 {dimension_numbers = #tpu.dot_dimension_numbers<[1], [0], [0], [1], [0, 0, 1, 1], [], []>} : vector<6x16xf32>, vector<16x6xf32>, vector<6x6xf32> -> vector<6x6xf32>
    %134 = vector.extract_strided_slice %131 {offsets = [16, 0], sizes = [16, 6], strides = [1, 1]} : vector<80x6xf32> to vector<16x6xf32>
    %cst_51 = arith.constant dense<0.000000e+00> : vector<6x6xf32>
    %135 = tpu.matmul %1, %134, %cst_51 {dimension_numbers = #tpu.dot_dimension_numbers<[1], [0], [0], [1], [0, 0, 1, 1], [], []>} : vector<6x16xf32>, vector<16x6xf32>, vector<6x6xf32> -> vector<6x6xf32>
    %136 = vector.extract_strided_slice %131 {offsets = [32, 0], sizes = [16, 6], strides = [1, 1]} : vector<80x6xf32> to vector<16x6xf32>
    %cst_52 = arith.constant dense<0.000000e+00> : vector<6x6xf32>
    %137 = tpu.matmul %1, %136, %cst_52 {dimension_numbers = #tpu.dot_dimension_numbers<[1], [0], [0], [1], [0, 0, 1, 1], [], []>} : vector<6x16xf32>, vector<16x6xf32>, vector<6x6xf32> -> vector<6x6xf32>
    %138 = vector.extract_strided_slice %131 {offsets = [48, 0], sizes = [16, 6], strides = [1, 1]} : vector<80x6xf32> to vector<16x6xf32>
    %cst_53 = arith.constant dense<0.000000e+00> : vector<6x6xf32>
    %139 = tpu.matmul %1, %138, %cst_53 {dimension_numbers = #tpu.dot_dimension_numbers<[1], [0], [0], [1], [0, 0, 1, 1], [], []>} : vector<6x16xf32>, vector<16x6xf32>, vector<6x6xf32> -> vector<6x6xf32>
    %140 = vector.extract_strided_slice %131 {offsets = [64, 0], sizes = [16, 6], strides = [1, 1]} : vector<80x6xf32> to vector<16x6xf32>
    %cst_54 = arith.constant dense<0.000000e+00> : vector<6x6xf32>
    %141 = tpu.matmul %1, %140, %cst_54 {dimension_numbers = #tpu.dot_dimension_numbers<[1], [0], [0], [1], [0, 0, 1, 1], [], []>} : vector<6x16xf32>, vector<16x6xf32>, vector<6x6xf32> -> vector<6x6xf32>
    %142 = arith.mulf %133, %133 : vector<6x6xf32>
    %143 = arith.subf %137, %142 : vector<6x6xf32>
    %144 = arith.mulf %135, %135 : vector<6x6xf32>
    %145 = arith.subf %139, %144 : vector<6x6xf32>
    %146 = arith.mulf %133, %135 : vector<6x6xf32>
    %147 = arith.subf %141, %146 : vector<6x6xf32>
    %cst_55 = arith.constant 2.000000e+00 : f32
    %148 = vector.broadcast %cst_55 : f32 to vector<6x6xf32>
    %149 = arith.mulf %148, %133 : vector<6x6xf32>
    %150 = arith.mulf %149, %135 : vector<6x6xf32>
    %cst_56 = arith.constant 9.99999974E-5 : f32
    %151 = vector.broadcast %cst_56 : f32 to vector<6x6xf32>
    %152 = arith.addf %150, %151 : vector<6x6xf32>
    %cst_57 = arith.constant 2.000000e+00 : f32
    %153 = vector.broadcast %cst_57 : f32 to vector<6x6xf32>
    %154 = arith.mulf %153, %147 : vector<6x6xf32>
    %cst_58 = arith.constant 8.99999984E-4 : f32
    %155 = vector.broadcast %cst_58 : f32 to vector<6x6xf32>
    %156 = arith.addf %154, %155 : vector<6x6xf32>
    %157 = arith.mulf %152, %156 : vector<6x6xf32>
    %158 = arith.mulf %133, %133 : vector<6x6xf32>
    %159 = arith.mulf %135, %135 : vector<6x6xf32>
    %160 = arith.addf %158, %159 : vector<6x6xf32>
    %cst_59 = arith.constant 9.99999974E-5 : f32
    %161 = vector.broadcast %cst_59 : f32 to vector<6x6xf32>
    %162 = arith.addf %160, %161 : vector<6x6xf32>
    %163 = arith.addf %143, %145 : vector<6x6xf32>
    %cst_60 = arith.constant 8.99999984E-4 : f32
    %164 = vector.broadcast %cst_60 : f32 to vector<6x6xf32>
    %165 = arith.addf %163, %164 : vector<6x6xf32>
    %166 = arith.mulf %162, %165 : vector<6x6xf32>
    %167 = arith.divf %157, %166 : vector<6x6xf32>
    %168 = vector.shape_cast %167 : vector<6x6xf32> to vector<1x6x6xf32>
    %cst_61 = arith.constant dense<0.000000e+00> : vector<1xf32>
    %169 = vector.multi_reduction <add>, %168, %cst_61 [1, 2] : vector<1x6x6xf32> to vector<1xf32>
    %170 = vector.shape_cast %169 : vector<1xf32> to vector<1x1x1xf32>
    %171 = vector.extract %170[0, 0, 0] : f32 from vector<1x1x1xf32>
    %172 = arith.addf %115, %171 : f32
    %c3 = arith.constant 3 : index
    %c0_62 = arith.constant 0 : index
    %c0_63 = arith.constant 0 : index
    %173 = vector.load %arg1[%c3, %c0_62, %c0_63] : memref<4x16x16xf32, #tpu.memory_space<vmem>>, vector<1x16x16xf32>
    %174 = vector.shape_cast %173 : vector<1x16x16xf32> to vector<16x16xf32>
    %c3_64 = arith.constant 3 : index
    %c0_65 = arith.constant 0 : index
    %c0_66 = arith.constant 0 : index
    %175 = vector.load %arg2[%c3_64, %c0_65, %c0_66] : memref<4x16x16xf32, #tpu.memory_space<vmem>>, vector<1x16x16xf32>
    %176 = vector.shape_cast %175 : vector<1x16x16xf32> to vector<16x16xf32>
    %177 = arith.subf %174, %176 : vector<16x16xf32>
    %178 = arith.mulf %177, %177 : vector<16x16xf32>
    %179 = vector.shape_cast %178 : vector<16x16xf32> to vector<1x16x16xf32>
    %cst_67 = arith.constant dense<0.000000e+00> : vector<1xf32>
    %180 = vector.multi_reduction <add>, %179, %cst_67 [1, 2] : vector<1x16x16xf32> to vector<1xf32>
    %181 = vector.shape_cast %180 : vector<1xf32> to vector<1x1x1xf32>
    %182 = vector.extract %181[0, 0, 0] : f32 from vector<1x1x1xf32>
    %183 = arith.addf %126, %182 : f32
    %184 = arith.mulf %174, %174 : vector<16x16xf32>
    %185 = arith.mulf %176, %176 : vector<16x16xf32>
    %186 = arith.mulf %174, %176 : vector<16x16xf32>
    %187 = tpu.concatenate %174, %176, %184, %185, %186 in 0 : vector<16x16xf32>, vector<16x16xf32>, vector<16x16xf32>, vector<16x16xf32>, vector<16x16xf32> -> vector<80x16xf32>
    %cst_68 = arith.constant dense<0.000000e+00> : vector<80x6xf32>
    %188 = tpu.matmul %187, %0, %cst_68 {dimension_numbers = #tpu.dot_dimension_numbers<[1], [0], [0], [1], [0, 0, 1, 1], [], []>} : vector<80x16xf32>, vector<16x6xf32>, vector<80x6xf32> -> vector<80x6xf32>
    %189 = vector.extract_strided_slice %188 {offsets = [0, 0], sizes = [16, 6], strides = [1, 1]} : vector<80x6xf32> to vector<16x6xf32>
    %cst_69 = arith.constant dense<0.000000e+00> : vector<6x6xf32>
    %190 = tpu.matmul %1, %189, %cst_69 {dimension_numbers = #tpu.dot_dimension_numbers<[1], [0], [0], [1], [0, 0, 1, 1], [], []>} : vector<6x16xf32>, vector<16x6xf32>, vector<6x6xf32> -> vector<6x6xf32>
    %191 = vector.extract_strided_slice %188 {offsets = [16, 0], sizes = [16, 6], strides = [1, 1]} : vector<80x6xf32> to vector<16x6xf32>
    %cst_70 = arith.constant dense<0.000000e+00> : vector<6x6xf32>
    %192 = tpu.matmul %1, %191, %cst_70 {dimension_numbers = #tpu.dot_dimension_numbers<[1], [0], [0], [1], [0, 0, 1, 1], [], []>} : vector<6x16xf32>, vector<16x6xf32>, vector<6x6xf32> -> vector<6x6xf32>
    %193 = vector.extract_strided_slice %188 {offsets = [32, 0], sizes = [16, 6], strides = [1, 1]} : vector<80x6xf32> to vector<16x6xf32>
    %cst_71 = arith.constant dense<0.000000e+00> : vector<6x6xf32>
    %194 = tpu.matmul %1, %193, %cst_71 {dimension_numbers = #tpu.dot_dimension_numbers<[1], [0], [0], [1], [0, 0, 1, 1], [], []>} : vector<6x16xf32>, vector<16x6xf32>, vector<6x6xf32> -> vector<6x6xf32>
    %195 = vector.extract_strided_slice %188 {offsets = [48, 0], sizes = [16, 6], strides = [1, 1]} : vector<80x6xf32> to vector<16x6xf32>
    %cst_72 = arith.constant dense<0.000000e+00> : vector<6x6xf32>
    %196 = tpu.matmul %1, %195, %cst_72 {dimension_numbers = #tpu.dot_dimension_numbers<[1], [0], [0], [1], [0, 0, 1, 1], [], []>} : vector<6x16xf32>, vector<16x6xf32>, vector<6x6xf32> -> vector<6x6xf32>
    %197 = vector.extract_strided_slice %188 {offsets = [64, 0], sizes = [16, 6], strides = [1, 1]} : vector<80x6xf32> to vector<16x6xf32>
    %cst_73 = arith.constant dense<0.000000e+00> : vector<6x6xf32>
    %198 = tpu.matmul %1, %197, %cst_73 {dimension_numbers = #tpu.dot_dimension_numbers<[1], [0], [0], [1], [0, 0, 1, 1], [], []>} : vector<6x16xf32>, vector<16x6xf32>, vector<6x6xf32> -> vector<6x6xf32>
    %199 = arith.mulf %190, %190 : vector<6x6xf32>
    %200 = arith.subf %194, %199 : vector<6x6xf32>
    %201 = arith.mulf %192, %192 : vector<6x6xf32>
    %202 = arith.subf %196, %201 : vector<6x6xf32>
    %203 = arith.mulf %190, %192 : vector<6x6xf32>
    %204 = arith.subf %198, %203 : vector<6x6xf32>
    %cst_74 = arith.constant 2.000000e+00 : f32
    %205 = vector.broadcast %cst_74 : f32 to vector<6x6xf32>
    %206 = arith.mulf %205, %190 : vector<6x6xf32>
    %207 = arith.mulf %206, %192 : vector<6x6xf32>
    %cst_75 = arith.constant 9.99999974E-5 : f32
    %208 = vector.broadcast %cst_75 : f32 to vector<6x6xf32>
    %209 = arith.addf %207, %208 : vector<6x6xf32>
    %cst_76 = arith.constant 2.000000e+00 : f32
    %210 = vector.broadcast %cst_76 : f32 to vector<6x6xf32>
    %211 = arith.mulf %210, %204 : vector<6x6xf32>
    %cst_77 = arith.constant 8.99999984E-4 : f32
    %212 = vector.broadcast %cst_77 : f32 to vector<6x6xf32>
    %213 = arith.addf %211, %212 : vector<6x6xf32>
    %214 = arith.mulf %209, %213 : vector<6x6xf32>
    %215 = arith.mulf %190, %190 : vector<6x6xf32>
    %216 = arith.mulf %192, %192 : vector<6x6xf32>
    %217 = arith.addf %215, %216 : vector<6x6xf32>
    %cst_78 = arith.constant 9.99999974E-5 : f32
    %218 = vector.broadcast %cst_78 : f32 to vector<6x6xf32>
    %219 = arith.addf %217, %218 : vector<6x6xf32>
    %220 = arith.addf %200, %202 : vector<6x6xf32>
    %cst_79 = arith.constant 8.99999984E-4 : f32
    %221 = vector.broadcast %cst_79 : f32 to vector<6x6xf32>
    %222 = arith.addf %220, %221 : vector<6x6xf32>
    %223 = arith.mulf %219, %222 : vector<6x6xf32>
    %224 = arith.divf %214, %223 : vector<6x6xf32>
    %225 = vector.shape_cast %224 : vector<6x6xf32> to vector<1x6x6xf32>
    %cst_80 = arith.constant dense<0.000000e+00> : vector<1xf32>
    %226 = vector.multi_reduction <add>, %225, %cst_80 [1, 2] : vector<1x6x6xf32> to vector<1xf32>
    %227 = vector.shape_cast %226 : vector<1xf32> to vector<1x1x1xf32>
    %228 = vector.extract %227[0, 0, 0] : f32 from vector<1x1x1xf32>
    %229 = arith.addf %172, %228 : f32
    %230 = vector.broadcast %183 : f32 to vector<1x1x128xf32>
    %c0_81 = arith.constant 0 : index
    %c0_82 = arith.constant 0 : index
    %c0_83 = arith.constant 0 : index
    %231 = vector.load %arg5[%c0_81, %c0_82, %c0_83] : memref<1x2x128xf32, #tpu.memory_space<vmem>>, vector<1x1x128xf32>
    tpu.vector_store %arg5[%c0_81, %c0_82, %c0_83], %230 {strides = array<i32>} : memref<1x2x128xf32, #tpu.memory_space<vmem>>, vector<1x1x128xf32>,
    %232 = vector.broadcast %229 : f32 to vector<1x1x128xf32>
    %c0_84 = arith.constant 0 : index
    %c1_85 = arith.constant 1 : index
    %c0_86 = arith.constant 0 : index
    %233 = vector.load %arg5[%c0_84, %c1_85, %c0_86] : memref<1x2x128xf32, #tpu.memory_space<vmem>>, vector<1x1x128xf32>
    tpu.vector_store %arg5[%c0_84, %c1_85, %c0_86], %232 {strides = array<i32>} : memref<1x2x128xf32, #tpu.memory_space<vmem>>, vector<1x1x128xf32>,
    return
  }
  func.func @transform_0(%arg0: i32) -> (i32, i32, i32) {
    %c0_i32 = arith.constant 0 : i32
    %c0_i32_0 = arith.constant 0 : i32
    %c0_i32_1 = arith.constant 0 : i32
    return %arg0, %c0_i32, %c0_i32_0 : i32, i32, i32
  }
  func.func @transform_1(%arg0: i32) -> (i32, i32, i32) {
    %c0_i32 = arith.constant 0 : i32
    %c0_i32_0 = arith.constant 0 : i32
    %c0_i32_1 = arith.constant 0 : i32
    return %arg0, %c0_i32, %c0_i32_0 : i32, i32, i32
  }
  func.func @transform_2(%arg0: i32) -> (i32, i32) {
    %c0_i32 = arith.constant 0 : i32
    %c0_i32_0 = arith.constant 0 : i32
    %c0_i32_1 = arith.constant 0 : i32
    return %c0_i32, %c0_i32_0 : i32, i32
  }
  func.func @transform_3(%arg0: i32) -> (i32, i32) {
    %c0_i32 = arith.constant 0 : i32
    %c0_i32_0 = arith.constant 0 : i32
    %c0_i32_1 = arith.constant 0 : i32
    return %c0_i32, %c0_i32_0 : i32, i32
  }
  func.func @transform_4(%arg0: i32) -> (i32, i32, i32) {
    %c0_i32 = arith.constant 0 : i32
    %c0_i32_0 = arith.constant 0 : i32
    %c0_i32_1 = arith.constant 0 : i32
    return %arg0, %c0_i32, %c0_i32_0 : i32, i32, i32
  }
}

</mosaic_0001>

<llo_original>
// kernel: combined_loss.1
$region0: #{combined_loss.1}
  #allocation0 [shape = 'u32[]', space=smem, size = 0x4, offset = 0x4, fixed_abs, tag = 'smem constant byte address 0x4 - core index']
  #allocation1 [shape = 'u32[144,128]{1,0:T(1,128)}', space=vmem, size = 0x12000, scoped, tag = 'internal scratch']
  %s0 = inlined_call_operand.hbm [shape: f32[8,16,16], index: 0, kind: input, shape index: {}]
  %s1 = inlined_call_operand.hbm [shape: f32[8,16,16], index: 1, kind: input, shape index: {}]
  %s2 = inlined_call_operand.vmem [shape: f32[16,6], index: 2, kind: input, shape index: {}]
  %s3 = inlined_call_operand.vmem [shape: f32[6,16], index: 3, kind: input, shape index: {}]
  %s4 = inlined_call_operand.vmem [shape: f32[2,2,128], index: 4, kind: output, shape index: {}]
  %s5 = sld [smem:[#allocation0]]
  $region57: #{combined_loss.1} parent=0
    _
  %s7 = ssub.s32 1, %s5
  %s8 = scalar_select 0, %s7, %s5
  $region1: #{combined_loss.1} parent=0
    #allocation2 [shape = 'u8[65536]{0}', space=vmem, size = 0x10000, scoped, tag = 'input window, operand 0']
    #allocation3 [shape = 's32[2]{0}', space=sflag, size = 0x8, scoped, tag = 'scoped memory for combined_loss.1']
    #allocation4 [shape = 'u8[65536]{0}', space=vmem, size = 0x10000, scoped, tag = 'input window, operand 1']
    #allocation5 [shape = 's32[2]{0}', space=sflag, size = 0x8, scoped, tag = 'scoped memory for combined_loss.1']
    %9 = vsyncpa [#allocation3], 0
    %s10 = scalar_lea.sflag [#allocation3], 1
    %11 = vsyncpa %s10, 0
    %12 = vsyncpa [#allocation5], 0
    %s13 = scalar_lea.sflag [#allocation5], 1
    %14 = vsyncpa %s13, 0
    loop: start=0, step=1, limit=4
    $region2: #{combined_loss.1} parent=1 // loop_pre_header
      _
    $region3: #{combined_loss.1} parent=1 // loop_header
      %s16 = sphi 0, %s20
      %p17 = scmp.ge.s32.totalorder %s16, 4
      %s26 = sphi 0, %s28
      %s29 = sphi 0, %s26
      %s30 = sphi 0, %s29
      %s46 = sphi 0, %s30
      %s52 = sphi 0, %s54
      %s55 = sphi 0, %s52
      %s56 = sphi 0, %s55
      %s72 = sphi 0, %s56
      %s76 = sphi 0, %s76
      %s78 = sphi 0, %s76
      %s79 = sphi 0, %s78
      %s93 = sphi 0, %s79
      %s97 = sphi 0, %s97
      %s99 = sphi 0, %s97
      %s100 = sphi 0, %s99
      %s114 = sphi 0, %s100
      %s120 = sphi 0, %s122
      %s123 = sphi 0, %s120
      %s124 = sphi 0, %s123
      %s140 = sphi 0, %s124
    $region4: #{combined_loss.1} parent=1 // loop_header_branch
      %19 = sbr.rel (%p17) target = $region8
    $region5: #{combined_loss.1} parent=1 // loop_body
      %s21 = ssub.s32 %s16, 1
      %s22 = ssub.s32 %s16, 2
      %s23 = sadd.s32 %s16, 1
      %s24 = ssub.s32 %s16, %s23
      %p25 = scmp.eq.s32.totalorder %s24, 0
      %s27 = sadd.s32 %s26, 1
      %s28 = scalar_select %p25, %s26, %s27
      %p31 = pneg %p25
      %p32 = scmp.eq.s32.totalorder %s16, 1
      %p33 = por %p31, %p32
      %p34 = scmp.ne.s32.totalorder %s26, %s29
      %p35 = scmp.eq.s32.totalorder %s16, 0
      %p36 = por %p34, %p35
      %p37 = scmp.ne.s32.totalorder %s26, %s29
      %p38 = scmp.eq.s32.totalorder %s21, 1
      %p39 = por %p37, %p38
      %p40 = scmp.ne.s32.totalorder %s29, %s30
      %p41 = scmp.eq.s32.totalorder %s21, 0
      %p42 = por %p40, %p41
      %p43 = scmp.ne.s32.totalorder %s29, %s30
      %p44 = scmp.eq.s32.totalorder %s22, 1
      %p45 = por %p43, %p44
      %p47 = scmp.ne.s32.totalorder %s30, %s46
      %p48 = scmp.eq.s32.totalorder %s22, 0
      %p49 = por %p47, %p48
      %s50 = ssub.s32 %s16, %s23
      %p51 = scmp.eq.s32.totalorder %s50, 0
      %s53 = sadd.s32 %s52, 1
      %s54 = scalar_select %p51, %s52, %s53
      %p57 = pneg %p51
      %p58 = scmp.eq.s32.totalorder %s16, 1
      %p59 = por %p57, %p58
      %p60 = scmp.ne.s32.totalorder %s52, %s55
      %p61 = scmp.eq.s32.totalorder %s16, 0
      %p62 = por %p60, %p61
      %p63 = scmp.ne.s32.totalorder %s52, %s55
      %p64 = scmp.eq.s32.totalorder %s21, 1
      %p65 = por %p63, %p64
      %p66 = scmp.ne.s32.totalorder %s55, %s56
      %p67 = scmp.eq.s32.totalorder %s21, 0
      %p68 = por %p66, %p67
      %p69 = scmp.ne.s32.totalorder %s55, %s56
      %p70 = scmp.eq.s32.totalorder %s22, 1
      %p71 = por %p69, %p70
      %p73 = scmp.ne.s32.totalorder %s56, %s72
      %p74 = scmp.eq.s32.totalorder %s22, 0
      %p75 = por %p73, %p74
      %s77 = sadd.s32 %s76, 1
      %p80 = scmp.eq.s32.totalorder %s16, 1
      %p81 = scmp.ne.s32.totalorder %s76, %s78
      %p82 = scmp.eq.s32.totalorder %s16, 0
      %p83 = por %p81, %p82
      %p84 = scmp.ne.s32.totalorder %s76, %s78
      %p85 = scmp.eq.s32.totalorder %s21, 1
      %p86 = por %p84, %p85
      %p87 = scmp.ne.s32.totalorder %s78, %s79
      %p88 = scmp.eq.s32.totalorder %s21, 0
      %p89 = por %p87, %p88
      %p90 = scmp.ne.s32.totalorder %s78, %s79
      %p91 = scmp.eq.s32.totalorder %s22, 1
      %p92 = por %p90, %p91
      %p94 = scmp.ne.s32.totalorder %s79, %s93
      %p95 = scmp.eq.s32.totalorder %s22, 0
      %p96 = por %p94, %p95
      %s98 = sadd.s32 %s97, 1
      %p101 = scmp.eq.s32.totalorder %s16, 1
      %p102 = scmp.ne.s32.totalorder %s97, %s99
      %p103 = scmp.eq.s32.totalorder %s16, 0
      %p104 = por %p102, %p103
      %p105 = scmp.ne.s32.totalorder %s97, %s99
      %p106 = scmp.eq.s32.totalorder %s21, 1
      %p107 = por %p105, %p106
      %p108 = scmp.ne.s32.totalorder %s99, %s100
      %p109 = scmp.eq.s32.totalorder %s21, 0
      %p110 = por %p108, %p109
      %p111 = scmp.ne.s32.totalorder %s99, %s100
      %p112 = scmp.eq.s32.totalorder %s22, 1
      %p113 = por %p111, %p112
      %p115 = scmp.ne.s32.totalorder %s100, %s114
      %p116 = scmp.eq.s32.totalorder %s22, 0
      %p117 = por %p115, %p116
      %s118 = ssub.s32 %s16, %s23
      %p119 = scmp.eq.s32.totalorder %s118, 0
      %s121 = sadd.s32 %s120, 1
      %s122 = scalar_select %p119, %s120, %s121
      %p125 = pneg %p119
      %p126 = scmp.eq.s32.totalorder %s16, 1
      %p127 = por %p125, %p126
      %p128 = scmp.ne.s32.totalorder %s120, %s123
      %p129 = scmp.eq.s32.totalorder %s16, 0
      %p130 = por %p128, %p129
      %p131 = scmp.ne.s32.totalorder %s120, %s123
      %p132 = scmp.eq.s32.totalorder %s21, 1
      %p133 = por %p131, %p132
      %p134 = scmp.ne.s32.totalorder %s123, %s124
      %p135 = scmp.eq.s32.totalorder %s21, 0
      %p136 = por %p134, %p135
      %p137 = scmp.ne.s32.totalorder %s123, %s124
      %p138 = scmp.eq.s32.totalorder %s22, 1
      %p139 = por %p137, %p138
      %p141 = scmp.ne.s32.totalorder %s124, %s140
      %p142 = scmp.eq.s32.totalorder %s22, 0
      %p143 = por %p141, %p142
      %p144 = scmp.le.s32.totalorder 1, %s16
      %p145 = scmp.lt.s32.totalorder %s16, 3
      %p146 = pnand %p144, %p145
      %p147 = pneg %p146
      // Predicated region
      $region9: #{combined_loss.1} parent=5 // pred_check
        _
      $region10: #{combined_loss.1} parent=5 // pred_check_branch
        %149 = sbr.rel (%p146) target = $region12
      $region11: #{combined_loss.1} parent=5 // pred_region
        %s150 = ssub.s32 %s16, 1
        // Predicated region
        $region13: #{combined_loss.1} parent=11 // pred_check
          %p151 = pneg %p89
        $region14: #{combined_loss.1} parent=11 // pred_check_branch
          %153 = sbr.rel (%p151) target = $region16
        $region15: #{combined_loss.1} parent=11 // pred_region
          _
        $region16: #{combined_loss.1} parent=11 // pred_fallthru
          _
        // Predicated region
        $region17: #{combined_loss.1} parent=11 // pred_check
          %p154 = pneg %p110
        $region18: #{combined_loss.1} parent=11 // pred_check_branch
          %156 = sbr.rel (%p154) target = $region20
        $region19: #{combined_loss.1} parent=11 // pred_region
          _
        $region20: #{combined_loss.1} parent=11 // pred_fallthru
          _
      $region12: #{combined_loss.1} parent=5 // pred_fallthru
        _
      %p157 = scmp.lt.s32.totalorder %s16, 2
      // Predicated region
      $region21: #{combined_loss.1} parent=5 // pred_check
        %p158 = pneg %p157
      $region22: #{combined_loss.1} parent=5 // pred_check_branch
        %160 = sbr.rel (%p158) target = $region24
      $region23: #{combined_loss.1} parent=5 // pred_region
        // Predicated region
        $region25: #{combined_loss.1} parent=23 // pred_check
          %p161 = pneg %p36
        $region26: #{combined_loss.1} parent=23 // pred_check_branch
          %163 = sbr.rel (%p161) target = $region28
        $region27: #{combined_loss.1} parent=23 // pred_region
          %s164 = sand.u32 %s26, 1
          %s165 = scalar_lea.sflag [#allocation3], %s164
          %s166 = sand.u32 %s26, 1
          %s167 = smul.addr %s166, 64
          %s168 = scalar_lea.vmem [#allocation2], %s167
          %s169 = smul.u32 4, %s16
          %s171 = ssub.s32 1024, 1024
          %172 = vsyncadd %s165, %s171
          %s173 = smul.addr %s169, 2
          %s174 = smul.addr %s173, 128
          %s175 = scalar_lea.hbm %s0, %s174
          %s176 = sshll.u32 %s168, 4
          %s177 = int_to_ptr.vmem [resolvable:$true] %s176
          %182 = dma.hbm_to_vmem [thread:$0]  %s175, 1024, %s177, %s165, 128, 128, 8
        $region28: #{combined_loss.1} parent=23 // pred_fallthru
          _
        // Predicated region
        $region29: #{combined_loss.1} parent=23 // pred_check
          %p183 = pneg %p62
        $region30: #{combined_loss.1} parent=23 // pred_check_branch
          %185 = sbr.rel (%p183) target = $region32
        $region31: #{combined_loss.1} parent=23 // pred_region
          %s186 = sand.u32 %s52, 1
          %s187 = scalar_lea.sflag [#allocation5], %s186
          %s188 = sand.u32 %s52, 1
          %s189 = smul.addr %s188, 64
          %s190 = scalar_lea.vmem [#allocation4], %s189
          %s191 = smul.u32 4, %s16
          %s193 = ssub.s32 1024, 1024
          %194 = vsyncadd %s187, %s193
          %s195 = smul.addr %s191, 2
          %s196 = smul.addr %s195, 128
          %s197 = scalar_lea.hbm %s1, %s196
          %s198 = sshll.u32 %s190, 4
          %s199 = int_to_ptr.vmem [resolvable:$true] %s198
          %204 = dma.hbm_to_vmem [thread:$0]  %s197, 1024, %s199, %s187, 128, 128, 8
        $region32: #{combined_loss.1} parent=23 // pred_fallthru
          _
      $region24: #{combined_loss.1} parent=5 // pred_fallthru
        _
      %p205 = scmp.le.s32.totalorder 1, %s16
      %p206 = scmp.lt.s32.totalorder %s16, 3
      %p207 = pnand %p205, %p206
      %p208 = pneg %p207
      // Predicated region
      $region33: #{combined_loss.1} parent=5 // pred_check
        _
      $region34: #{combined_loss.1} parent=5 // pred_check_branch
        %210 = sbr.rel (%p207) target = $region36
      $region35: #{combined_loss.1} parent=5 // pred_region
        %s211 = ssub.s32 %s16, 1
        %s212 = sand.u32 %s29, 1
        %s213 = scalar_lea.sflag [#allocation3], %s212
        %s214 = sand.u32 %s29, 1
        %s215 = smul.addr %s214, 64
        %s216 = scalar_lea.vmem [#allocation2], %s215
        // Predicated region
        $region37: #{combined_loss.1} parent=35 // pred_check
          %p217 = pneg %p42
        $region38: #{combined_loss.1} parent=35 // pred_check_branch
          %219 = sbr.rel (%p217) target = $region40
        $region39: #{combined_loss.1} parent=35 // pred_region
          %220 = dma.done %s213, 1024
        $region40: #{combined_loss.1} parent=35 // pred_fallthru
          _
        %s221 = sand.u32 %s55, 1
        %s222 = scalar_lea.sflag [#allocation5], %s221
        %s223 = sand.u32 %s55, 1
        %s224 = smul.addr %s223, 64
        %s225 = scalar_lea.vmem [#allocation4], %s224
        // Predicated region
        $region41: #{combined_loss.1} parent=35 // pred_check
          %p226 = pneg %p68
        $region42: #{combined_loss.1} parent=35 // pred_check_branch
          %228 = sbr.rel (%p226) target = $region44
        $region43: #{combined_loss.1} parent=35 // pred_region
          %229 = dma.done %s222, 1024
        $region44: #{combined_loss.1} parent=35 // pred_fallthru
          _
        %s230 = sand.u32 %s29, 1
        %s231 = scalar_lea.sflag [#allocation3], %s230
        %s232 = sand.u32 %s29, 1
        %s233 = smul.addr %s232, 64
        %s234 = scalar_lea.vmem [#allocation2], %s233
        %p235 = pneg %p42
        %p236 = pneg %p39
        %s237 = sand.u32 %s55, 1
        %s238 = scalar_lea.sflag [#allocation5], %s237
        %s239 = sand.u32 %s55, 1
        %s240 = smul.addr %s239, 64
        %s241 = scalar_lea.vmem [#allocation4], %s240
        %p242 = pneg %p68
        %p243 = pneg %p65
        %p244 = pneg %p89
        %p245 = pneg %p86
        %p246 = pneg %p110
        %p247 = pneg %p107
        %p248 = pneg %p136
        %p249 = pneg %p133
        %p250 = scmp.lt.s32.totalorder %s21, 1
        %s251 = scalar_select %p250, %s21, 1
        %s252 = smul.addr %s251, 2
        %s253 = scalar_lea.vmem %s4, %s252
        %s254 = smul.u32 4, %s21
        %s255 = smul.u32 4, %s21
        %p256 = scmp.lt.s32.totalorder %s21, 1
        %s257 = scalar_select %p256, %s21, 1
        %s258 = smul.addr %s257, 2
        %s259 = scalar_lea.vmem %s4, %s258
        %v260 = vld [vmem:[%s2] sm:$0xff]
        %v261 = vld [vmem:[%s2 + $0x8] sm:$0xff]
        %v262 = vld [vmem:[%s3] sm:$0x3f]
        %v263 = vld [vmem:[%s216] sm:$0xff]
        %v264 = vld [vmem:[%s216 + $0x8] sm:$0xff]
        %v265 = vld [vmem:[%s225] sm:$0xff]
        %v266 = vld [vmem:[%s225 + $0x8] sm:$0xff]
        %v267 = vsub.f32 %v263, %v265
        %v268 = vsub.f32 %v264, %v266
        %v269 = vmul.f32 %v267, %v267
        %v270 = vmul.f32 %v268, %v268
        %vm271 = vcmask 130048
        %v272 = vsel %vm271, %v269, 0.0
        %v273 = vsel %vm271, %v270, 0.0
        %v274 = vadd.f32 %v272, %v273
        %275 = vadd.xlane.f32.xlu0 %v274
        %v276 = vpop.xlane.xlu0 %275
        %v277 = vrot.slane %v276, 4
        %v278 = vadd.f32 %v276, %v277
        %v279 = vrot.slane %v278, 2
        %v280 = vadd.f32 %v278, %v279
        %v281 = vrot.slane %v280, 1
        %v282 = vadd.f32 %v280, %v281
        %s283 = vtos %v282
        %s284 = sadd.f32 %s283, 0.0
        %v285 = vmul.f32 %v263, %v263
        %v286 = vmul.f32 %v264, %v264
        %v287 = vmul.f32 %v265, %v265
        %v288 = vmul.f32 %v266, %v266
        %v289 = vmul.f32 %v263, %v265
        %v290 = vmul.f32 %v264, %v266
        %v292 = vsel %vm271, %v263, 0
        %v295 = vsel %vm271, %v264, 0
        %v298 = vsel %vm271, %v265, 0
        %v301 = vsel %vm271, %v266, 0
        %v304 = vsel %vm271, %v285, 0
        %v307 = vsel %vm271, %v286, 0
        %v310 = vsel %vm271, %v287, 0
        %v313 = vsel %vm271, %v288, 0
        %v316 = vsel %vm271, %v289, 0
        %v319 = vsel %vm271, %v290, 0
        %321 = vmatprep.subr.mxu0 0.0
        %322 = vmatpush1.msra.mxu0 %v260
        %323 = vmatprep.subr.mxu0 0.0
        %324 = vmatpush1.msra.mxu0 %v261
        %325 = vmatprep.subr.mxu0 0.0
        %326 = vmatpush1.msra.mxu0 0.0
        %327 = vmatprep.subr.mxu0 0.0
        %328 = vmatpush1.msra.mxu0 0.0
        %329 = vmatprep.subr.mxu0 0.0
        %330 = vmatpush1.msra.mxu0 0.0
        %331 = vmatprep.subr.mxu0 0.0
        %332 = vmatpush1.msra.mxu0 0.0
        %333 = vmatprep.subr.mxu0 0.0
        %334 = vmatpush1.msra.mxu0 0.0
        %335 = vmatprep.subr.mxu0 0.0
        %336 = vmatpush1.msra.mxu0 0.0
        %337 = vmatprep.subr.mxu0 0.0
        %338 = vmatpush1.msra.mxu0 0.0
        %339 = vmatprep.subr.mxu0 0.0
        %340 = vmatpush1.msra.mxu0 0.0
        %341 = vmatprep.subr.mxu0 0.0
        %342 = vmatpush1.msra.mxu0 0.0
        %343 = vmatprep.subr.mxu0 0.0
        %344 = vmatpush1.msra.mxu0 0.0
        %345 = vmatprep.subr.mxu0 0.0
        %346 = vmatpush1.msra.mxu0 0.0
        %347 = vmatprep.subr.mxu0 0.0
        %348 = vmatpush1.msra.mxu0 0.0
        %349 = vmatprep.subr.mxu0 0.0
        %350 = vmatpush1.msra.mxu0 0.0
        %351 = vmatprep.subr.mxu0 0.0
        %352 = vmatpush1.msra.mxu0 0.0
        %353 = vmatprep.subr.mxu0 0.0
        %354 = vmatpush1.msra.mxu0 0.0
        %355 = vmatprep.subr.mxu0 0.0
        %356 = vmatpush1.msra.mxu0 0.0
        %357 = vmatprep.subr.mxu0 0.0
        %358 = vmatpush1.msra.mxu0 0.0
        %359 = vmatprep.subr.mxu0 0.0
        %360 = vmatpush1.msra.mxu0 0.0
        %361 = vmatprep.subr.mxu0 0.0
        %362 = vmatpush1.msra.mxu0 0.0
        %363 = vmatprep.subr.mxu0 0.0
        %364 = vmatpush1.msra.mxu0 0.0
        %365 = vmatprep.subr.mxu0 0.0
        %366 = vmatpush1.msra.mxu0 0.0
        %367 = vmatprep.subr.mxu0 0.0
        %368 = vmatpush1.msra.mxu0 0.0
        %369 = vmatprep.subr.mxu0 0.0
        %370 = vmatpush1.msra.mxu0 0.0
        %371 = vmatprep.subr.mxu0 0.0
        %372 = vmatpush1.msra.mxu0 0.0
        %373 = vmatprep.subr.mxu0 0.0
        %374 = vmatpush1.msra.mxu0 0.0
        %375 = vmatprep.subr.mxu0 0.0
        %376 = vmatpush1.msra.mxu0 0.0
        %377 = vmatprep.subr.mxu0 0.0
        %378 = vmatpush1.msra.mxu0 0.0
        %379 = vmatprep.subr.mxu0 0.0
        %380 = vmatpush1.msra.mxu0 0.0
        %381 = vmatprep.subr.mxu0 0.0
        %382 = vmatpush1.msra.mxu0 0.0
        %383 = vmatprep.subr.mxu0 0.0
        %384 = vmatpush1.msra.mxu0 0.0
        %385 = vmatprep.mubr.f32.mxu0 0.0
        %386 = vmatmul.mubr.f32.gmra.mrb[0].mxu0 %v292
        %v387 = vpop.f32.mrb[0].mxu0
        %v388 = vadd.f32 0.0, %v387
        %v389 = vpop.f32.mrb[0].mxu0
        %390 = vmatprep.mubr.f32.mxu0 0.0
        %391 = vmatmul.mubr.f32.gmra.mrb[0].mxu0 %v295
        %v392 = vpop.f32.mrb[0].mxu0
        %v393 = vadd.f32 0.0, %v392
        %v394 = vpop.f32.mrb[0].mxu0
        %395 = vmatprep.mubr.f32.mxu0 0.0
        %396 = vmatmul.mubr.f32.gmra.mrb[0].mxu0 %v298
        %v397 = vpop.f32.mrb[0].mxu0
        %v398 = vadd.f32 0.0, %v397
        %v399 = vpop.f32.mrb[0].mxu0
        %400 = vmatprep.mubr.f32.mxu0 0.0
        %401 = vmatmul.mubr.f32.gmra.mrb[0].mxu0 %v301
        %v402 = vpop.f32.mrb[0].mxu0
        %v403 = vadd.f32 0.0, %v402
        %v404 = vpop.f32.mrb[0].mxu0
        %405 = vmatprep.mubr.f32.mxu0 0.0
        %406 = vmatmul.mubr.f32.gmra.mrb[0].mxu0 %v304
        %v407 = vpop.f32.mrb[0].mxu0
        %v408 = vadd.f32 0.0, %v407
        %v409 = vpop.f32.mrb[0].mxu0
        %410 = vmatprep.mubr.f32.mxu0 0.0
        %411 = vmatmul.mubr.f32.gmra.mrb[0].mxu0 %v307
        %v412 = vpop.f32.mrb[0].mxu0
        %v413 = vadd.f32 0.0, %v412
        %v414 = vpop.f32.mrb[0].mxu0
        %415 = vmatprep.mubr.f32.mxu0 0.0
        %416 = vmatmul.mubr.f32.gmra.mrb[0].mxu0 %v310
        %v417 = vpop.f32.mrb[0].mxu0
        %v418 = vadd.f32 0.0, %v417
        %v419 = vpop.f32.mrb[0].mxu0
        %420 = vmatprep.mubr.f32.mxu0 0.0
        %421 = vmatmul.mubr.f32.gmra.mrb[0].mxu0 %v313
        %v422 = vpop.f32.mrb[0].mxu0
        %v423 = vadd.f32 0.0, %v422
        %v424 = vpop.f32.mrb[0].mxu0
        %425 = vmatprep.mubr.f32.mxu0 0.0
        %426 = vmatmul.mubr.f32.gmra.mrb[0].mxu0 %v316
        %v427 = vpop.f32.mrb[0].mxu0
        %v428 = vadd.f32 0.0, %v427
        %v429 = vpop.f32.mrb[0].mxu0
        %430 = vmatprep.mubr.f32.mxu0 0.0
        %431 = vmatmul.mubr.f32.gmra.mrb[0].mxu0 %v319
        %v432 = vpop.f32.mrb[0].mxu0
        %v433 = vadd.f32 0.0, %v432
        %v434 = vpop.f32.mrb[0].mxu0
        %435 = vdwg.mxu0
        %v437 = vsel %vm271, %v262, 0
        %439 = vmatprep.subr.mxu0 0.0
        %440 = vmatpush1.msra.mxu0 %v388
        %441 = vmatprep.subr.mxu0 0.0
        %442 = vmatpush1.msra.mxu0 %v393
        %443 = vmatprep.subr.mxu0 0.0
        %444 = vmatpush1.msra.mxu0 0.0
        %445 = vmatprep.subr.mxu0 0.0
        %446 = vmatpush1.msra.mxu0 0.0
        %447 = vmatprep.subr.mxu0 0.0
        %448 = vmatpush1.msra.mxu0 0.0
        %449 = vmatprep.subr.mxu0 0.0
        %450 = vmatpush1.msra.mxu0 0.0
        %451 = vmatprep.subr.mxu0 0.0
        %452 = vmatpush1.msra.mxu0 0.0
        %453 = vmatprep.subr.mxu0 0.0
        %454 = vmatpush1.msra.mxu0 0.0
        %455 = vmatprep.subr.mxu0 0.0
        %456 = vmatpush1.msra.mxu0 0.0
        %457 = vmatprep.subr.mxu0 0.0
        %458 = vmatpush1.msra.mxu0 0.0
        %459 = vmatprep.subr.mxu0 0.0
        %460 = vmatpush1.msra.mxu0 0.0
        %461 = vmatprep.subr.mxu0 0.0
        %462 = vmatpush1.msra.mxu0 0.0
        %463 = vmatprep.subr.mxu0 0.0
        %464 = vmatpush1.msra.mxu0 0.0
        %465 = vmatprep.subr.mxu0 0.0
        %466 = vmatpush1.msra.mxu0 0.0
        %467 = vmatprep.subr.mxu0 0.0
        %468 = vmatpush1.msra.mxu0 0.0
        %469 = vmatprep.subr.mxu0 0.0
        %470 = vmatpush1.msra.mxu0 0.0
        %471 = vmatprep.subr.mxu0 0.0
        %472 = vmatpush1.msra.mxu0 0.0
        %473 = vmatprep.subr.mxu0 0.0
        %474 = vmatpush1.msra.mxu0 0.0
        %475 = vmatprep.subr.mxu0 0.0
        %476 = vmatpush1.msra.mxu0 0.0
        %477 = vmatprep.subr.mxu0 0.0
        %478 = vmatpush1.msra.mxu0 0.0
        %479 = vmatprep.subr.mxu0 0.0
        %480 = vmatpush1.msra.mxu0 0.0
        %481 = vmatprep.subr.mxu0 0.0
        %482 = vmatpush1.msra.mxu0 0.0
        %483 = vmatprep.subr.mxu0 0.0
        %484 = vmatpush1.msra.mxu0 0.0
        %485 = vmatprep.subr.mxu0 0.0
        %486 = vmatpush1.msra.mxu0 0.0
        %487 = vmatprep.subr.mxu0 0.0
        %488 = vmatpush1.msra.mxu0 0.0
        %489 = vmatprep.subr.mxu0 0.0
        %490 = vmatpush1.msra.mxu0 0.0
        %491 = vmatprep.subr.mxu0 0.0
        %492 = vmatpush1.msra.mxu0 0.0
        %493 = vmatprep.subr.mxu0 0.0
        %494 = vmatpush1.msra.mxu0 0.0
        %495 = vmatprep.subr.mxu0 0.0
        %496 = vmatpush1.msra.mxu0 0.0
        %497 = vmatprep.subr.mxu0 0.0
        %498 = vmatpush1.msra.mxu0 0.0
        %499 = vmatprep.subr.mxu0 0.0
        %500 = vmatpush1.msra.mxu0 0.0
        %501 = vmatprep.subr.mxu0 0.0
        %502 = vmatpush1.msra.mxu0 0.0
        %503 = vmatprep.mubr.f32.mxu0 0.0
        %504 = vmatmul.mubr.f32.gmra.mrb[0].mxu0 %v437
        %v505 = vpop.f32.mrb[0].mxu0
        %v506 = vadd.f32 0.0, %v505
        %v507 = vpop.f32.mrb[0].mxu0
        %508 = vdwg.mxu0
        %509 = vmatprep.subr.mxu0 0.0
        %510 = vmatpush1.msra.mxu0 %v398
        %511 = vmatprep.subr.mxu0 0.0
        %512 = vmatpush1.msra.mxu0 %v403
        %513 = vmatprep.subr.mxu0 0.0
        %514 = vmatpush1.msra.mxu0 0.0
        %515 = vmatprep.subr.mxu0 0.0
        %516 = vmatpush1.msra.mxu0 0.0
        %517 = vmatprep.subr.mxu0 0.0
        %518 = vmatpush1.msra.mxu0 0.0
        %519 = vmatprep.subr.mxu0 0.0
        %520 = vmatpush1.msra.mxu0 0.0
        %521 = vmatprep.subr.mxu0 0.0
        %522 = vmatpush1.msra.mxu0 0.0
        %523 = vmatprep.subr.mxu0 0.0
        %524 = vmatpush1.msra.mxu0 0.0
        %525 = vmatprep.subr.mxu0 0.0
        %526 = vmatpush1.msra.mxu0 0.0
        %527 = vmatprep.subr.mxu0 0.0
        %528 = vmatpush1.msra.mxu0 0.0
        %529 = vmatprep.subr.mxu0 0.0
        %530 = vmatpush1.msra.mxu0 0.0
        %531 = vmatprep.subr.mxu0 0.0
        %532 = vmatpush1.msra.mxu0 0.0
        %533 = vmatprep.subr.mxu0 0.0
        %534 = vmatpush1.msra.mxu0 0.0
        %535 = vmatprep.subr.mxu0 0.0
        %536 = vmatpush1.msra.mxu0 0.0
        %537 = vmatprep.subr.mxu0 0.0
        %538 = vmatpush1.msra.mxu0 0.0
        %539 = vmatprep.subr.mxu0 0.0
        %540 = vmatpush1.msra.mxu0 0.0
        %541 = vmatprep.subr.mxu0 0.0
        %542 = vmatpush1.msra.mxu0 0.0
        %543 = vmatprep.subr.mxu0 0.0
        %544 = vmatpush1.msra.mxu0 0.0
        %545 = vmatprep.subr.mxu0 0.0
        %546 = vmatpush1.msra.mxu0 0.0
        %547 = vmatprep.subr.mxu0 0.0
        %548 = vmatpush1.msra.mxu0 0.0
        %549 = vmatprep.subr.mxu0 0.0
        %550 = vmatpush1.msra.mxu0 0.0
        %551 = vmatprep.subr.mxu0 0.0
        %552 = vmatpush1.msra.mxu0 0.0
        %553 = vmatprep.subr.mxu0 0.0
        %554 = vmatpush1.msra.mxu0 0.0
        %555 = vmatprep.subr.mxu0 0.0
        %556 = vmatpush1.msra.mxu0 0.0
        %557 = vmatprep.subr.mxu0 0.0
        %558 = vmatpush1.msra.mxu0 0.0
        %559 = vmatprep.subr.mxu0 0.0
        %560 = vmatpush1.msra.mxu0 0.0
        %561 = vmatprep.subr.mxu0 0.0
        %562 = vmatpush1.msra.mxu0 0.0
        %563 = vmatprep.subr.mxu0 0.0
        %564 = vmatpush1.msra.mxu0 0.0
        %565 = vmatprep.subr.mxu0 0.0
        %566 = vmatpush1.msra.mxu0 0.0
        %567 = vmatprep.subr.mxu0 0.0
        %568 = vmatpush1.msra.mxu0 0.0
        %569 = vmatprep.subr.mxu0 0.0
        %570 = vmatpush1.msra.mxu0 0.0
        %571 = vmatprep.subr.mxu0 0.0
        %572 = vmatpush1.msra.mxu0 0.0
        %573 = vmatprep.mubr.f32.mxu0 0.0
        %574 = vmatmul.mubr.f32.gmra.mrb[0].mxu0 %v437
        %v575 = vpop.f32.mrb[0].mxu0
        %v576 = vadd.f32 0.0, %v575
        %v577 = vpop.f32.mrb[0].mxu0
        %578 = vdwg.mxu0
        %579 = vmatprep.subr.mxu0 0.0
        %580 = vmatpush1.msra.mxu0 %v408
        %581 = vmatprep.subr.mxu0 0.0
        %582 = vmatpush1.msra.mxu0 %v413
        %583 = vmatprep.subr.mxu0 0.0
        %584 = vmatpush1.msra.mxu0 0.0
        %585 = vmatprep.subr.mxu0 0.0
        %586 = vmatpush1.msra.mxu0 0.0
        %587 = vmatprep.subr.mxu0 0.0
        %588 = vmatpush1.msra.mxu0 0.0
        %589 = vmatprep.subr.mxu0 0.0
        %590 = vmatpush1.msra.mxu0 0.0
        %591 = vmatprep.subr.mxu0 0.0
        %592 = vmatpush1.msra.mxu0 0.0
        %593 = vmatprep.subr.mxu0 0.0
        %594 = vmatpush1.msra.mxu0 0.0
        %595 = vmatprep.subr.mxu0 0.0
        %596 = vmatpush1.msra.mxu0 0.0
        %597 = vmatprep.subr.mxu0 0.0
        %598 = vmatpush1.msra.mxu0 0.0
        %599 = vmatprep.subr.mxu0 0.0
        %600 = vmatpush1.msra.mxu0 0.0
        %601 = vmatprep.subr.mxu0 0.0
        %602 = vmatpush1.msra.mxu0 0.0
        %603 = vmatprep.subr.mxu0 0.0
        %604 = vmatpush1.msra.mxu0 0.0
        %605 = vmatprep.subr.mxu0 0.0
        %606 = vmatpush1.msra.mxu0 0.0
        %607 = vmatprep.subr.mxu0 0.0
        %608 = vmatpush1.msra.mxu0 0.0
        %609 = vmatprep.subr.mxu0 0.0
        %610 = vmatpush1.msra.mxu0 0.0
        %611 = vmatprep.subr.mxu0 0.0
        %612 = vmatpush1.msra.mxu0 0.0
        %613 = vmatprep.subr.mxu0 0.0
        %614 = vmatpush1.msra.mxu0 0.0
        %615 = vmatprep.subr.mxu0 0.0
        %616 = vmatpush1.msra.mxu0 0.0
        %617 = vmatprep.subr.mxu0 0.0
        %618 = vmatpush1.msra.mxu0 0.0
        %619 = vmatprep.subr.mxu0 0.0
        %620 = vmatpush1.msra.mxu0 0.0
        %621 = vmatprep.subr.mxu0 0.0
        %622 = vmatpush1.msra.mxu0 0.0
        %623 = vmatprep.subr.mxu0 0.0
        %624 = vmatpush1.msra.mxu0 0.0
        %625 = vmatprep.subr.mxu0 0.0
        %626 = vmatpush1.msra.mxu0 0.0
        %627 = vmatprep.subr.mxu0 0.0
        %628 = vmatpush1.msra.mxu0 0.0
        %629 = vmatprep.subr.mxu0 0.0
        %630 = vmatpush1.msra.mxu0 0.0
        %631 = vmatprep.subr.mxu0 0.0
        %632 = vmatpush1.msra.mxu0 0.0
        %633 = vmatprep.subr.mxu0 0.0
        %634 = vmatpush1.msra.mxu0 0.0
        %635 = vmatprep.subr.mxu0 0.0
        %636 = vmatpush1.msra.mxu0 0.0
        %637 = vmatprep.subr.mxu0 0.0
        %638 = vmatpush1.msra.mxu0 0.0
        %639 = vmatprep.subr.mxu0 0.0
        %640 = vmatpush1.msra.mxu0 0.0
        %641 = vmatprep.subr.mxu0 0.0
        %642 = vmatpush1.msra.mxu0 0.0
        %643 = vmatprep.mubr.f32.mxu0 0.0
        %644 = vmatmul.mubr.f32.gmra.mrb[0].mxu0 %v437
        %v645 = vpop.f32.mrb[0].mxu0
        %v646 = vadd.f32 0.0, %v645
        %v647 = vpop.f32.mrb[0].mxu0
        %648 = vdwg.mxu0
        %649 = vmatprep.subr.mxu0 0.0
        %650 = vmatpush1.msra.mxu0 %v418
        %651 = vmatprep.subr.mxu0 0.0
        %652 = vmatpush1.msra.mxu0 %v423
        %653 = vmatprep.subr.mxu0 0.0
        %654 = vmatpush1.msra.mxu0 0.0
        %655 = vmatprep.subr.mxu0 0.0
        %656 = vmatpush1.msra.mxu0 0.0
        %657 = vmatprep.subr.mxu0 0.0
        %658 = vmatpush1.msra.mxu0 0.0
        %659 = vmatprep.subr.mxu0 0.0
        %660 = vmatpush1.msra.mxu0 0.0
        %661 = vmatprep.subr.mxu0 0.0
        %662 = vmatpush1.msra.mxu0 0.0
        %663 = vmatprep.subr.mxu0 0.0
        %664 = vmatpush1.msra.mxu0 0.0
        %665 = vmatprep.subr.mxu0 0.0
        %666 = vmatpush1.msra.mxu0 0.0
        %667 = vmatprep.subr.mxu0 0.0
        %668 = vmatpush1.msra.mxu0 0.0
        %669 = vmatprep.subr.mxu0 0.0
        %670 = vmatpush1.msra.mxu0 0.0
        %671 = vmatprep.subr.mxu0 0.0
        %672 = vmatpush1.msra.mxu0 0.0
        %673 = vmatprep.subr.mxu0 0.0
        %674 = vmatpush1.msra.mxu0 0.0
        %675 = vmatprep.subr.mxu0 0.0
        %676 = vmatpush1.msra.mxu0 0.0
        %677 = vmatprep.subr.mxu0 0.0
        %678 = vmatpush1.msra.mxu0 0.0
        %679 = vmatprep.subr.mxu0 0.0
        %680 = vmatpush1.msra.mxu0 0.0
        %681 = vmatprep.subr.mxu0 0.0
        %682 = vmatpush1.msra.mxu0 0.0
        %683 = vmatprep.subr.mxu0 0.0
        %684 = vmatpush1.msra.mxu0 0.0
        %685 = vmatprep.subr.mxu0 0.0
        %686 = vmatpush1.msra.mxu0 0.0
        %687 = vmatprep.subr.mxu0 0.0
        %688 = vmatpush1.msra.mxu0 0.0
        %689 = vmatprep.subr.mxu0 0.0
        %690 = vmatpush1.msra.mxu0 0.0
        %691 = vmatprep.subr.mxu0 0.0
        %692 = vmatpush1.msra.mxu0 0.0
        %693 = vmatprep.subr.mxu0 0.0
        %694 = vmatpush1.msra.mxu0 0.0
        %695 = vmatprep.subr.mxu0 0.0
        %696 = vmatpush1.msra.mxu0 0.0
        %697 = vmatprep.subr.mxu0 0.0
        %698 = vmatpush1.msra.mxu0 0.0
        %699 = vmatprep.subr.mxu0 0.0
        %700 = vmatpush1.msra.mxu0 0.0
        %701 = vmatprep.subr.mxu0 0.0
        %702 = vmatpush1.msra.mxu0 0.0
        %703 = vmatprep.subr.mxu0 0.0
        %704 = vmatpush1.msra.mxu0 0.0
        %705 = vmatprep.subr.mxu0 0.0
        %706 = vmatpush1.msra.mxu0 0.0
        %707 = vmatprep.subr.mxu0 0.0
        %708 = vmatpush1.msra.mxu0 0.0
        %709 = vmatprep.subr.mxu0 0.0
        %710 = vmatpush1.msra.mxu0 0.0
        %711 = vmatprep.subr.mxu0 0.0
        %712 = vmatpush1.msra.mxu0 0.0
        %713 = vmatprep.mubr.f32.mxu0 0.0
        %714 = vmatmul.mubr.f32.gmra.mrb[0].mxu0 %v437
        %v715 = vpop.f32.mrb[0].mxu0
        %v716 = vadd.f32 0.0, %v715
        %v717 = vpop.f32.mrb[0].mxu0
        %718 = vdwg.mxu0
        %719 = vmatprep.subr.mxu0 0.0
        %720 = vmatpush1.msra.mxu0 %v428
        %721 = vmatprep.subr.mxu0 0.0
        %722 = vmatpush1.msra.mxu0 %v433
        %723 = vmatprep.subr.mxu0 0.0
        %724 = vmatpush1.msra.mxu0 0.0
        %725 = vmatprep.subr.mxu0 0.0
        %726 = vmatpush1.msra.mxu0 0.0
        %727 = vmatprep.subr.mxu0 0.0
        %728 = vmatpush1.msra.mxu0 0.0
        %729 = vmatprep.subr.mxu0 0.0
        %730 = vmatpush1.msra.mxu0 0.0
        %731 = vmatprep.subr.mxu0 0.0
        %732 = vmatpush1.msra.mxu0 0.0
        %733 = vmatprep.subr.mxu0 0.0
        %734 = vmatpush1.msra.mxu0 0.0
        %735 = vmatprep.subr.mxu0 0.0
        %736 = vmatpush1.msra.mxu0 0.0
        %737 = vmatprep.subr.mxu0 0.0
        %738 = vmatpush1.msra.mxu0 0.0
        %739 = vmatprep.subr.mxu0 0.0
        %740 = vmatpush1.msra.mxu0 0.0
        %741 = vmatprep.subr.mxu0 0.0
        %742 = vmatpush1.msra.mxu0 0.0
        %743 = vmatprep.subr.mxu0 0.0
        %744 = vmatpush1.msra.mxu0 0.0
        %745 = vmatprep.subr.mxu0 0.0
        %746 = vmatpush1.msra.mxu0 0.0
        %747 = vmatprep.subr.mxu0 0.0
        %748 = vmatpush1.msra.mxu0 0.0
        %749 = vmatprep.subr.mxu0 0.0
        %750 = vmatpush1.msra.mxu0 0.0
        %751 = vmatprep.subr.mxu0 0.0
        %752 = vmatpush1.msra.mxu0 0.0
        %753 = vmatprep.subr.mxu0 0.0
        %754 = vmatpush1.msra.mxu0 0.0
        %755 = vmatprep.subr.mxu0 0.0
        %756 = vmatpush1.msra.mxu0 0.0
        %757 = vmatprep.subr.mxu0 0.0
        %758 = vmatpush1.msra.mxu0 0.0
        %759 = vmatprep.subr.mxu0 0.0
        %760 = vmatpush1.msra.mxu0 0.0
        %761 = vmatprep.subr.mxu0 0.0
        %762 = vmatpush1.msra.mxu0 0.0
        %763 = vmatprep.subr.mxu0 0.0
        %764 = vmatpush1.msra.mxu0 0.0
        %765 = vmatprep.subr.mxu0 0.0
        %766 = vmatpush1.msra.mxu0 0.0
        %767 = vmatprep.subr.mxu0 0.0
        %768 = vmatpush1.msra.mxu0 0.0
        %769 = vmatprep.subr.mxu0 0.0
        %770 = vmatpush1.msra.mxu0 0.0
        %771 = vmatprep.subr.mxu0 0.0
        %772 = vmatpush1.msra.mxu0 0.0
        %773 = vmatprep.subr.mxu0 0.0
        %774 = vmatpush1.msra.mxu0 0.0
        %775 = vmatprep.subr.mxu0 0.0
        %776 = vmatpush1.msra.mxu0 0.0
        %777 = vmatprep.subr.mxu0 0.0
        %778 = vmatpush1.msra.mxu0 0.0
        %779 = vmatprep.subr.mxu0 0.0
        %780 = vmatpush1.msra.mxu0 0.0
        %781 = vmatprep.subr.mxu0 0.0
        %782 = vmatpush1.msra.mxu0 0.0
        %783 = vmatprep.mubr.f32.mxu0 0.0
        %784 = vmatmul.mubr.f32.gmra.mrb[0].mxu0 %v437
        %v785 = vpop.f32.mrb[0].mxu0
        %v786 = vadd.f32 0.0, %v785
        %v787 = vpop.f32.mrb[0].mxu0
        %788 = vdwg.mxu0
        %v789 = vmul.f32 %v506, %v506
        %v790 = vsub.f32 %v646, %v789
        %v791 = vmul.f32 %v576, %v576
        %v792 = vsub.f32 %v716, %v791
        %v793 = vmul.f32 %v506, %v576
        %v794 = vsub.f32 %v786, %v793
        %v795 = vmul.f32 %v506, 2.0
        %v796 = vmul.f32 %v795, %v576
        %v797 = vadd.f32 %v796, 0.0001
        %v798 = vmul.f32 %v794, 2.0
        %v799 = vadd.f32 %v798, 0.0009
        %v800 = vmul.f32 %v797, %v799
        %v801 = vadd.f32 %v789, %v791
        %v802 = vadd.f32 %v801, 0.0001
        %v803 = vadd.f32 %v790, %v792
        %v804 = vadd.f32 %v803, 0.0009
        %v805 = vmul.f32 %v802, %v804
        %v806 = vrcp.pop %v805
        %v807 = vmul.f32 %v800, %v806
        %vm808 = vcmask 46080
        %v809 = vsel %vm808, %v807, 0.0
        %810 = vadd.xlane.f32.xlu0 %v809
        %v811 = vpop.xlane.xlu0 %810
        %v812 = vrot.slane %v811, 4
        %v813 = vadd.f32 %v811, %v812
        %v814 = vrot.slane %v813, 2
        %v815 = vadd.f32 %v813, %v814
        %v816 = vrot.slane %v815, 1
        %v817 = vadd.f32 %v815, %v816
        %s818 = vtos %v817
        %s819 = sadd.f32 %s818, 0.0
        %s820 = scalar_lea.vmem %s216, 16 [#allocation2]
        %v821 = vld [vmem:[%s820] sm:$0xff]
        %v822 = vld [vmem:[%s820 + $0x8] sm:$0xff]
        %s823 = scalar_lea.vmem %s225, 16 [#allocation4]
        %v824 = vld [vmem:[%s823] sm:$0xff]
        %v825 = vld [vmem:[%s823 + $0x8] sm:$0xff]
        %v826 = vsub.f32 %v821, %v824
        %v827 = vsub.f32 %v822, %v825
        %v828 = vmul.f32 %v826, %v826
        %v829 = vmul.f32 %v827, %v827
        %v830 = vsel %vm271, %v828, 0.0
        %v831 = vsel %vm271, %v829, 0.0
        %v832 = vadd.f32 %v830, %v831
        %833 = vadd.xlane.f32.xlu0 %v832
        %v834 = vpop.xlane.xlu0 %833
        %v835 = vrot.slane %v834, 4
        %v836 = vadd.f32 %v834, %v835
        %v837 = vrot.slane %v836, 2
        %v838 = vadd.f32 %v836, %v837
        %v839 = vrot.slane %v838, 1
        %v840 = vadd.f32 %v838, %v839
        %s841 = vtos %v840
        %s842 = sadd.f32 %s284, %s841
        %v843 = vmul.f32 %v821, %v821
        %v844 = vmul.f32 %v822, %v822
        %v845 = vmul.f32 %v824, %v824
        %v846 = vmul.f32 %v825, %v825
        %v847 = vmul.f32 %v821, %v824
        %v848 = vmul.f32 %v822, %v825
        %v850 = vsel %vm271, %v821, 0
        %v853 = vsel %vm271, %v822, 0
        %v856 = vsel %vm271, %v824, 0
        %v859 = vsel %vm271, %v825, 0
        %v862 = vsel %vm271, %v843, 0
        %v865 = vsel %vm271, %v844, 0
        %v868 = vsel %vm271, %v845, 0
        %v871 = vsel %vm271, %v846, 0
        %v874 = vsel %vm271, %v847, 0
        %v877 = vsel %vm271, %v848, 0
        %879 = vmatprep.subr.mxu0 0.0
        %880 = vmatpush1.msra.mxu0 %v260
        %881 = vmatprep.subr.mxu0 0.0
        %882 = vmatpush1.msra.mxu0 %v261
        %883 = vmatprep.subr.mxu0 0.0
        %884 = vmatpush1.msra.mxu0 0.0
        %885 = vmatprep.subr.mxu0 0.0
        %886 = vmatpush1.msra.mxu0 0.0
        %887 = vmatprep.subr.mxu0 0.0
        %888 = vmatpush1.msra.mxu0 0.0
        %889 = vmatprep.subr.mxu0 0.0
        %890 = vmatpush1.msra.mxu0 0.0
        %891 = vmatprep.subr.mxu0 0.0
        %892 = vmatpush1.msra.mxu0 0.0
        %893 = vmatprep.subr.mxu0 0.0
        %894 = vmatpush1.msra.mxu0 0.0
        %895 = vmatprep.subr.mxu0 0.0
        %896 = vmatpush1.msra.mxu0 0.0
        %897 = vmatprep.subr.mxu0 0.0
        %898 = vmatpush1.msra.mxu0 0.0
        %899 = vmatprep.subr.mxu0 0.0
        %900 = vmatpush1.msra.mxu0 0.0
        %901 = vmatprep.subr.mxu0 0.0
        %902 = vmatpush1.msra.mxu0 0.0
        %903 = vmatprep.subr.mxu0 0.0
        %904 = vmatpush1.msra.mxu0 0.0
        %905 = vmatprep.subr.mxu0 0.0
        %906 = vmatpush1.msra.mxu0 0.0
        %907 = vmatprep.subr.mxu0 0.0
        %908 = vmatpush1.msra.mxu0 0.0
        %909 = vmatprep.subr.mxu0 0.0
        %910 = vmatpush1.msra.mxu0 0.0
        %911 = vmatprep.subr.mxu0 0.0
        %912 = vmatpush1.msra.mxu0 0.0
        %913 = vmatprep.subr.mxu0 0.0
        %914 = vmatpush1.msra.mxu0 0.0
        %915 = vmatprep.subr.mxu0 0.0
        %916 = vmatpush1.msra.mxu0 0.0
        %917 = vmatprep.subr.mxu0 0.0
        %918 = vmatpush1.msra.mxu0 0.0
        %919 = vmatprep.subr.mxu0 0.0
        %920 = vmatpush1.msra.mxu0 0.0
        %921 = vmatprep.subr.mxu0 0.0
        %922 = vmatpush1.msra.mxu0 0.0
        %923 = vmatprep.subr.mxu0 0.0
        %924 = vmatpush1.msra.mxu0 0.0
        %925 = vmatprep.subr.mxu0 0.0
        %926 = vmatpush1.msra.mxu0 0.0
        %927 = vmatprep.subr.mxu0 0.0
        %928 = vmatpush1.msra.mxu0 0.0
        %929 = vmatprep.subr.mxu0 0.0
        %930 = vmatpush1.msra.mxu0 0.0
        %931 = vmatprep.subr.mxu0 0.0
        %932 = vmatpush1.msra.mxu0 0.0
        %933 = vmatprep.subr.mxu0 0.0
        %934 = vmatpush1.msra.mxu0 0.0
        %935 = vmatprep.subr.mxu0 0.0
        %936 = vmatpush1.msra.mxu0 0.0
        %937 = vmatprep.subr.mxu0 0.0
        %938 = vmatpush1.msra.mxu0 0.0
        %939 = vmatprep.subr.mxu0 0.0
        %940 = vmatpush1.msra.mxu0 0.0
        %941 = vmatprep.subr.mxu0 0.0
        %942 = vmatpush1.msra.mxu0 0.0
        %943 = vmatprep.mubr.f32.mxu0 0.0
        %944 = vmatmul.mubr.f32.gmra.mrb[0].mxu0 %v850
        %v945 = vpop.f32.mrb[0].mxu0
        %v946 = vadd.f32 0.0, %v945
        %v947 = vpop.f32.mrb[0].mxu0
        %948 = vmatprep.mubr.f32.mxu0 0.0
        %949 = vmatmul.mubr.f32.gmra.mrb[0].mxu0 %v853
        %v950 = vpop.f32.mrb[0].mxu0
        %v951 = vadd.f32 0.0, %v950
        %v952 = vpop.f32.mrb[0].mxu0
        %953 = vmatprep.mubr.f32.mxu0 0.0
        %954 = vmatmul.mubr.f32.gmra.mrb[0].mxu0 %v856
        %v955 = vpop.f32.mrb[0].mxu0
        %v956 = vadd.f32 0.0, %v955
        %v957 = vpop.f32.mrb[0].mxu0
        %958 = vmatprep.mubr.f32.mxu0 0.0
        %959 = vmatmul.mubr.f32.gmra.mrb[0].mxu0 %v859
        %v960 = vpop.f32.mrb[0].mxu0
        %v961 = vadd.f32 0.0, %v960
        %v962 = vpop.f32.mrb[0].mxu0
        %963 = vmatprep.mubr.f32.mxu0 0.0
        %964 = vmatmul.mubr.f32.gmra.mrb[0].mxu0 %v862
        %v965 = vpop.f32.mrb[0].mxu0
        %v966 = vadd.f32 0.0, %v965
        %v967 = vpop.f32.mrb[0].mxu0
        %968 = vmatprep.mubr.f32.mxu0 0.0
        %969 = vmatmul.mubr.f32.gmra.mrb[0].mxu0 %v865
        %v970 = vpop.f32.mrb[0].mxu0
        %v971 = vadd.f32 0.0, %v970
        %v972 = vpop.f32.mrb[0].mxu0
        %973 = vmatprep.mubr.f32.mxu0 0.0
        %974 = vmatmul.mubr.f32.gmra.mrb[0].mxu0 %v868
        %v975 = vpop.f32.mrb[0].mxu0
        %v976 = vadd.f32 0.0, %v975
        %v977 = vpop.f32.mrb[0].mxu0
        %978 = vmatprep.mubr.f32.mxu0 0.0
        %979 = vmatmul.mubr.f32.gmra.mrb[0].mxu0 %v871
        %v980 = vpop.f32.mrb[0].mxu0
        %v981 = vadd.f32 0.0, %v980
        %v982 = vpop.f32.mrb[0].mxu0
        %983 = vmatprep.mubr.f32.mxu0 0.0
        %984 = vmatmul.mubr.f32.gmra.mrb[0].mxu0 %v874
        %v985 = vpop.f32.mrb[0].mxu0
        %v986 = vadd.f32 0.0, %v985
        %v987 = vpop.f32.mrb[0].mxu0
        %988 = vmatprep.mubr.f32.mxu0 0.0
        %989 = vmatmul.mubr.f32.gmra.mrb[0].mxu0 %v877
        %v990 = vpop.f32.mrb[0].mxu0
        %v991 = vadd.f32 0.0, %v990
        %v992 = vpop.f32.mrb[0].mxu0
        %993 = vdwg.mxu0
        %994 = vmatprep.subr.mxu0 0.0
        %995 = vmatpush1.msra.mxu0 %v946
        %996 = vmatprep.subr.mxu0 0.0
        %997 = vmatpush1.msra.mxu0 %v951
        %998 = vmatprep.subr.mxu0 0.0
        %999 = vmatpush1.msra.mxu0 0.0
        %1000 = vmatprep.subr.mxu0 0.0
        %1001 = vmatpush1.msra.mxu0 0.0
        %1002 = vmatprep.subr.mxu0 0.0
        %1003 = vmatpush1.msra.mxu0 0.0
        %1004 = vmatprep.subr.mxu0 0.0
        %1005 = vmatpush1.msra.mxu0 0.0
        %1006 = vmatprep.subr.mxu0 0.0
        %1007 = vmatpush1.msra.mxu0 0.0
        %1008 = vmatprep.subr.mxu0 0.0
        %1009 = vmatpush1.msra.mxu0 0.0
        %1010 = vmatprep.subr.mxu0 0.0
        %1011 = vmatpush1.msra.mxu0 0.0
        %1012 = vmatprep.subr.mxu0 0.0
        %1013 = vmatpush1.msra.mxu0 0.0
        %1014 = vmatprep.subr.mxu0 0.0
        %1015 = vmatpush1.msra.mxu0 0.0
        %1016 = vmatprep.subr.mxu0 0.0
        %1017 = vmatpush1.msra.mxu0 0.0
        %1018 = vmatprep.subr.mxu0 0.0
        %1019 = vmatpush1.msra.mxu0 0.0
        %1020 = vmatprep.subr.mxu0 0.0
        %1021 = vmatpush1.msra.mxu0 0.0
        %1022 = vmatprep.subr.mxu0 0.0
        %1023 = vmatpush1.msra.mxu0 0.0
        %1024 = vmatprep.subr.mxu0 0.0
        %1025 = vmatpush1.msra.mxu0 0.0
        %1026 = vmatprep.subr.mxu0 0.0
        %1027 = vmatpush1.msra.mxu0 0.0
        %1028 = vmatprep.subr.mxu0 0.0
        %1029 = vmatpush1.msra.mxu0 0.0
        %1030 = vmatprep.subr.mxu0 0.0
        %1031 = vmatpush1.msra.mxu0 0.0
        %1032 = vmatprep.subr.mxu0 0.0
        %1033 = vmatpush1.msra.mxu0 0.0
        %1034 = vmatprep.subr.mxu0 0.0
        %1035 = vmatpush1.msra.mxu0 0.0
        %1036 = vmatprep.subr.mxu0 0.0
        %1037 = vmatpush1.msra.mxu0 0.0
        %1038 = vmatprep.subr.mxu0 0.0
        %1039 = vmatpush1.msra.mxu0 0.0
        %1040 = vmatprep.subr.mxu0 0.0
        %1041 = vmatpush1.msra.mxu0 0.0
        %1042 = vmatprep.subr.mxu0 0.0
        %1043 = vmatpush1.msra.mxu0 0.0
        %1044 = vmatprep.subr.mxu0 0.0
        %1045 = vmatpush1.msra.mxu0 0.0
        %1046 = vmatprep.subr.mxu0 0.0
        %1047 = vmatpush1.msra.mxu0 0.0
        %1048 = vmatprep.subr.mxu0 0.0
        %1049 = vmatpush1.msra.mxu0 0.0
        %1050 = vmatprep.subr.mxu0 0.0
        %1051 = vmatpush1.msra.mxu0 0.0
        %1052 = vmatprep.subr.mxu0 0.0
        %1053 = vmatpush1.msra.mxu0 0.0
        %1054 = vmatprep.subr.mxu0 0.0
        %1055 = vmatpush1.msra.mxu0 0.0
        %1056 = vmatprep.subr.mxu0 0.0
        %1057 = vmatpush1.msra.mxu0 0.0
        %1058 = vmatprep.mubr.f32.mxu0 0.0
        %1059 = vmatmul.mubr.f32.gmra.mrb[0].mxu0 %v437
        %v1060 = vpop.f32.mrb[0].mxu0
        %v1061 = vadd.f32 0.0, %v1060
        %v1062 = vpop.f32.mrb[0].mxu0
        %1063 = vdwg.mxu0
        %1064 = vmatprep.subr.mxu0 0.0
        %1065 = vmatpush1.msra.mxu0 %v956
        %1066 = vmatprep.subr.mxu0 0.0
        %1067 = vmatpush1.msra.mxu0 %v961
        %1068 = vmatprep.subr.mxu0 0.0
        %1069 = vmatpush1.msra.mxu0 0.0
        %1070 = vmatprep.subr.mxu0 0.0
        %1071 = vmatpush1.msra.mxu0 0.0
        %1072 = vmatprep.subr.mxu0 0.0
        %1073 = vmatpush1.msra.mxu0 0.0
        %1074 = vmatprep.subr.mxu0 0.0
        %1075 = vmatpush1.msra.mxu0 0.0
        %1076 = vmatprep.subr.mxu0 0.0
        %1077 = vmatpush1.msra.mxu0 0.0
        %1078 = vmatprep.subr.mxu0 0.0
        %1079 = vmatpush1.msra.mxu0 0.0
        %1080 = vmatprep.subr.mxu0 0.0
        %1081 = vmatpush1.msra.mxu0 0.0
        %1082 = vmatprep.subr.mxu0 0.0
        %1083 = vmatpush1.msra.mxu0 0.0
        %1084 = vmatprep.subr.mxu0 0.0
        %1085 = vmatpush1.msra.mxu0 0.0
        %1086 = vmatprep.subr.mxu0 0.0
        %1087 = vmatpush1.msra.mxu0 0.0
        %1088 = vmatprep.subr.mxu0 0.0
        %1089 = vmatpush1.msra.mxu0 0.0
        %1090 = vmatprep.subr.mxu0 0.0
        %1091 = vmatpush1.msra.mxu0 0.0
        %1092 = vmatprep.subr.mxu0 0.0
        %1093 = vmatpush1.msra.mxu0 0.0
        %1094 = vmatprep.subr.mxu0 0.0
        %1095 = vmatpush1.msra.mxu0 0.0
        %1096 = vmatprep.subr.mxu0 0.0
        %1097 = vmatpush1.msra.mxu0 0.0
        %1098 = vmatprep.subr.mxu0 0.0
        %1099 = vmatpush1.msra.mxu0 0.0
        %1100 = vmatprep.subr.mxu0 0.0
        %1101 = vmatpush1.msra.mxu0 0.0
        %1102 = vmatprep.subr.mxu0 0.0
        %1103 = vmatpush1.msra.mxu0 0.0
        %1104 = vmatprep.subr.mxu0 0.0
        %1105 = vmatpush1.msra.mxu0 0.0
        %1106 = vmatprep.subr.mxu0 0.0
        %1107 = vmatpush1.msra.mxu0 0.0
        %1108 = vmatprep.subr.mxu0 0.0
        %1109 = vmatpush1.msra.mxu0 0.0
        %1110 = vmatprep.subr.mxu0 0.0
        %1111 = vmatpush1.msra.mxu0 0.0
        %1112 = vmatprep.subr.mxu0 0.0
        %1113 = vmatpush1.msra.mxu0 0.0
        %1114 = vmatprep.subr.mxu0 0.0
        %1115 = vmatpush1.msra.mxu0 0.0
        %1116 = vmatprep.subr.mxu0 0.0
        %1117 = vmatpush1.msra.mxu0 0.0
        %1118 = vmatprep.subr.mxu0 0.0
        %1119 = vmatpush1.msra.mxu0 0.0
        %1120 = vmatprep.subr.mxu0 0.0
        %1121 = vmatpush1.msra.mxu0 0.0
        %1122 = vmatprep.subr.mxu0 0.0
        %1123 = vmatpush1.msra.mxu0 0.0
        %1124 = vmatprep.subr.mxu0 0.0
        %1125 = vmatpush1.msra.mxu0 0.0
        %1126 = vmatprep.subr.mxu0 0.0
        %1127 = vmatpush1.msra.mxu0 0.0
        %1128 = vmatprep.mubr.f32.mxu0 0.0
        %1129 = vmatmul.mubr.f32.gmra.mrb[0].mxu0 %v437
        %v1130 = vpop.f32.mrb[0].mxu0
        %v1131 = vadd.f32 0.0, %v1130
        %v1132 = vpop.f32.mrb[0].mxu0
        %1133 = vdwg.mxu0
        %1134 = vmatprep.subr.mxu0 0.0
        %1135 = vmatpush1.msra.mxu0 %v966
        %1136 = vmatprep.subr.mxu0 0.0
        %1137 = vmatpush1.msra.mxu0 %v971
        %1138 = vmatprep.subr.mxu0 0.0
        %1139 = vmatpush1.msra.mxu0 0.0
        %1140 = vmatprep.subr.mxu0 0.0
        %1141 = vmatpush1.msra.mxu0 0.0
        %1142 = vmatprep.subr.mxu0 0.0
        %1143 = vmatpush1.msra.mxu0 0.0
        %1144 = vmatprep.subr.mxu0 0.0
        %1145 = vmatpush1.msra.mxu0 0.0
        %1146 = vmatprep.subr.mxu0 0.0
        %1147 = vmatpush1.msra.mxu0 0.0
        %1148 = vmatprep.subr.mxu0 0.0
        %1149 = vmatpush1.msra.mxu0 0.0
        %1150 = vmatprep.subr.mxu0 0.0
        %1151 = vmatpush1.msra.mxu0 0.0
        %1152 = vmatprep.subr.mxu0 0.0
        %1153 = vmatpush1.msra.mxu0 0.0
        %1154 = vmatprep.subr.mxu0 0.0
        %1155 = vmatpush1.msra.mxu0 0.0
        %1156 = vmatprep.subr.mxu0 0.0
        %1157 = vmatpush1.msra.mxu0 0.0
        %1158 = vmatprep.subr.mxu0 0.0
        %1159 = vmatpush1.msra.mxu0 0.0
        %1160 = vmatprep.subr.mxu0 0.0
        %1161 = vmatpush1.msra.mxu0 0.0
        %1162 = vmatprep.subr.mxu0 0.0
        %1163 = vmatpush1.msra.mxu0 0.0
        %1164 = vmatprep.subr.mxu0 0.0
        %1165 = vmatpush1.msra.mxu0 0.0
        %1166 = vmatprep.subr.mxu0 0.0
        %1167 = vmatpush1.msra.mxu0 0.0
        %1168 = vmatprep.subr.mxu0 0.0
        %1169 = vmatpush1.msra.mxu0 0.0
        %1170 = vmatprep.subr.mxu0 0.0
        %1171 = vmatpush1.msra.mxu0 0.0
        %1172 = vmatprep.subr.mxu0 0.0
        %1173 = vmatpush1.msra.mxu0 0.0
        %1174 = vmatprep.subr.mxu0 0.0
        %1175 = vmatpush1.msra.mxu0 0.0
        %1176 = vmatprep.subr.mxu0 0.0
        %1177 = vmatpush1.msra.mxu0 0.0
        %1178 = vmatprep.subr.mxu0 0.0
        %1179 = vmatpush1.msra.mxu0 0.0
        %1180 = vmatprep.subr.mxu0 0.0
        %1181 = vmatpush1.msra.mxu0 0.0
        %1182 = vmatprep.subr.mxu0 0.0
        %1183 = vmatpush1.msra.mxu0 0.0
        %1184 = vmatprep.subr.mxu0 0.0
        %1185 = vmatpush1.msra.mxu0 0.0
        %1186 = vmatprep.subr.mxu0 0.0
        %1187 = vmatpush1.msra.mxu0 0.0
        %1188 = vmatprep.subr.mxu0 0.0
        %1189 = vmatpush1.msra.mxu0 0.0
        %1190 = vmatprep.subr.mxu0 0.0
        %1191 = vmatpush1.msra.mxu0 0.0
        %1192 = vmatprep.subr.mxu0 0.0
        %1193 = vmatpush1.msra.mxu0 0.0
        %1194 = vmatprep.subr.mxu0 0.0
        %1195 = vmatpush1.msra.mxu0 0.0
        %1196 = vmatprep.subr.mxu0 0.0
        %1197 = vmatpush1.msra.mxu0 0.0
        %1198 = vmatprep.mubr.f32.mxu0 0.0
        %1199 = vmatmul.mubr.f32.gmra.mrb[0].mxu0 %v437
        %v1200 = vpop.f32.mrb[0].mxu0
        %v1201 = vadd.f32 0.0, %v1200
        %v1202 = vpop.f32.mrb[0].mxu0
        %1203 = vdwg.mxu0
        %1204 = vmatprep.subr.mxu0 0.0
        %1205 = vmatpush1.msra.mxu0 %v976
        %1206 = vmatprep.subr.mxu0 0.0
        %1207 = vmatpush1.msra.mxu0 %v981
        %1208 = vmatprep.subr.mxu0 0.0
        %1209 = vmatpush1.msra.mxu0 0.0
        %1210 = vmatprep.subr.mxu0 0.0
        %1211 = vmatpush1.msra.mxu0 0.0
        %1212 = vmatprep.subr.mxu0 0.0
        %1213 = vmatpush1.msra.mxu0 0.0
        %1214 = vmatprep.subr.mxu0 0.0
        %1215 = vmatpush1.msra.mxu0 0.0
        %1216 = vmatprep.subr.mxu0 0.0
        %1217 = vmatpush1.msra.mxu0 0.0
        %1218 = vmatprep.subr.mxu0 0.0
        %1219 = vmatpush1.msra.mxu0 0.0
        %1220 = vmatprep.subr.mxu0 0.0
        %1221 = vmatpush1.msra.mxu0 0.0
        %1222 = vmatprep.subr.mxu0 0.0
        %1223 = vmatpush1.msra.mxu0 0.0
        %1224 = vmatprep.subr.mxu0 0.0
        %1225 = vmatpush1.msra.mxu0 0.0
        %1226 = vmatprep.subr.mxu0 0.0
        %1227 = vmatpush1.msra.mxu0 0.0
        %1228 = vmatprep.subr.mxu0 0.0
        %1229 = vmatpush1.msra.mxu0 0.0
        %1230 = vmatprep.subr.mxu0 0.0
        %1231 = vmatpush1.msra.mxu0 0.0
        %1232 = vmatprep.subr.mxu0 0.0
        %1233 = vmatpush1.msra.mxu0 0.0
        %1234 = vmatprep.subr.mxu0 0.0
        %1235 = vmatpush1.msra.mxu0 0.0
        %1236 = vmatprep.subr.mxu0 0.0
        %1237 = vmatpush1.msra.mxu0 0.0
        %1238 = vmatprep.subr.mxu0 0.0
        %1239 = vmatpush1.msra.mxu0 0.0
        %1240 = vmatprep.subr.mxu0 0.0
        %1241 = vmatpush1.msra.mxu0 0.0
        %1242 = vmatprep.subr.mxu0 0.0
        %1243 = vmatpush1.msra.mxu0 0.0
        %1244 = vmatprep.subr.mxu0 0.0
        %1245 = vmatpush1.msra.mxu0 0.0
        %1246 = vmatprep.subr.mxu0 0.0
        %1247 = vmatpush1.msra.mxu0 0.0
        %1248 = vmatprep.subr.mxu0 0.0
        %1249 = vmatpush1.msra.mxu0 0.0
        %1250 = vmatprep.subr.mxu0 0.0
        %1251 = vmatpush1.msra.mxu0 0.0
        %1252 = vmatprep.subr.mxu0 0.0
        %1253 = vmatpush1.msra.mxu0 0.0
        %1254 = vmatprep.subr.mxu0 0.0
        %1255 = vmatpush1.msra.mxu0 0.0
        %1256 = vmatprep.subr.mxu0 0.0
        %1257 = vmatpush1.msra.mxu0 0.0
        %1258 = vmatprep.subr.mxu0 0.0
        %1259 = vmatpush1.msra.mxu0 0.0
        %1260 = vmatprep.subr.mxu0 0.0
        %1261 = vmatpush1.msra.mxu0 0.0
        %1262 = vmatprep.subr.mxu0 0.0
        %1263 = vmatpush1.msra.mxu0 0.0
        %1264 = vmatprep.subr.mxu0 0.0
        %1265 = vmatpush1.msra.mxu0 0.0
        %1266 = vmatprep.subr.mxu0 0.0
        %1267 = vmatpush1.msra.mxu0 0.0
        %1268 = vmatprep.mubr.f32.mxu0 0.0
        %1269 = vmatmul.mubr.f32.gmra.mrb[0].mxu0 %v437
        %v1270 = vpop.f32.mrb[0].mxu0
        %v1271 = vadd.f32 0.0, %v1270
        %v1272 = vpop.f32.mrb[0].mxu0
        %1273 = vdwg.mxu0
        %1274 = vmatprep.subr.mxu0 0.0
        %1275 = vmatpush1.msra.mxu0 %v986
        %1276 = vmatprep.subr.mxu0 0.0
        %1277 = vmatpush1.msra.mxu0 %v991
        %1278 = vmatprep.subr.mxu0 0.0
        %1279 = vmatpush1.msra.mxu0 0.0
        %1280 = vmatprep.subr.mxu0 0.0
        %1281 = vmatpush1.msra.mxu0 0.0
        %1282 = vmatprep.subr.mxu0 0.0
        %1283 = vmatpush1.msra.mxu0 0.0
        %1284 = vmatprep.subr.mxu0 0.0
        %1285 = vmatpush1.msra.mxu0 0.0
        %1286 = vmatprep.subr.mxu0 0.0
        %1287 = vmatpush1.msra.mxu0 0.0
        %1288 = vmatprep.subr.mxu0 0.0
        %1289 = vmatpush1.msra.mxu0 0.0
        %1290 = vmatprep.subr.mxu0 0.0
        %1291 = vmatpush1.msra.mxu0 0.0
        %1292 = vmatprep.subr.mxu0 0.0
        %1293 = vmatpush1.msra.mxu0 0.0
        %1294 = vmatprep.subr.mxu0 0.0
        %1295 = vmatpush1.msra.mxu0 0.0
        %1296 = vmatprep.subr.mxu0 0.0
        %1297 = vmatpush1.msra.mxu0 0.0
        %1298 = vmatprep.subr.mxu0 0.0
        %1299 = vmatpush1.msra.mxu0 0.0
        %1300 = vmatprep.subr.mxu0 0.0
        %1301 = vmatpush1.msra.mxu0 0.0
        %1302 = vmatprep.subr.mxu0 0.0
        %1303 = vmatpush1.msra.mxu0 0.0
        %1304 = vmatprep.subr.mxu0 0.0
        %1305 = vmatpush1.msra.mxu0 0.0
        %1306 = vmatprep.subr.mxu0 0.0
        %1307 = vmatpush1.msra.mxu0 0.0
        %1308 = vmatprep.subr.mxu0 0.0
        %1309 = vmatpush1.msra.mxu0 0.0
        %1310 = vmatprep.subr.mxu0 0.0
        %1311 = vmatpush1.msra.mxu0 0.0
        %1312 = vmatprep.subr.mxu0 0.0
        %1313 = vmatpush1.msra.mxu0 0.0
        %1314 = vmatprep.subr.mxu0 0.0
        %1315 = vmatpush1.msra.mxu0 0.0
        %1316 = vmatprep.subr.mxu0 0.0
        %1317 = vmatpush1.msra.mxu0 0.0
        %1318 = vmatprep.subr.mxu0 0.0
        %1319 = vmatpush1.msra.mxu0 0.0
        %1320 = vmatprep.subr.mxu0 0.0
        %1321 = vmatpush1.msra.mxu0 0.0
        %1322 = vmatprep.subr.mxu0 0.0
        %1323 = vmatpush1.msra.mxu0 0.0
        %1324 = vmatprep.subr.mxu0 0.0
        %1325 = vmatpush1.msra.mxu0 0.0
        %1326 = vmatprep.subr.mxu0 0.0
        %1327 = vmatpush1.msra.mxu0 0.0
        %1328 = vmatprep.subr.mxu0 0.0
        %1329 = vmatpush1.msra.mxu0 0.0
        %1330 = vmatprep.subr.mxu0 0.0
        %1331 = vmatpush1.msra.mxu0 0.0
        %1332 = vmatprep.subr.mxu0 0.0
        %1333 = vmatpush1.msra.mxu0 0.0
        %1334 = vmatprep.subr.mxu0 0.0
        %1335 = vmatpush1.msra.mxu0 0.0
        %1336 = vmatprep.subr.mxu0 0.0
        %1337 = vmatpush1.msra.mxu0 0.0
        %1338 = vmatprep.mubr.f32.mxu0 0.0
        %1339 = vmatmul.mubr.f32.gmra.mrb[0].mxu0 %v437
        %v1340 = vpop.f32.mrb[0].mxu0
        %v1341 = vadd.f32 0.0, %v1340
        %v1342 = vpop.f32.mrb[0].mxu0
        %1343 = vdwg.mxu0
        %v1344 = vmul.f32 %v1061, %v1061
        %v1345 = vsub.f32 %v1201, %v1344
        %v1346 = vmul.f32 %v1131, %v1131
        %v1347 = vsub.f32 %v1271, %v1346
        %v1348 = vmul.f32 %v1061, %v1131
        %v1349 = vsub.f32 %v1341, %v1348
        %v1350 = vmul.f32 %v1061, 2.0
        %v1351 = vmul.f32 %v1350, %v1131
        %v1352 = vadd.f32 %v1351, 0.0001
        %v1353 = vmul.f32 %v1349, 2.0
        %v1354 = vadd.f32 %v1353, 0.0009
        %v1355 = vmul.f32 %v1352, %v1354
        %v1356 = vadd.f32 %v1344, %v1346
        %v1357 = vadd.f32 %v1356, 0.0001
        %v1358 = vadd.f32 %v1345, %v1347
        %v1359 = vadd.f32 %v1358, 0.0009
        %v1360 = vmul.f32 %v1357, %v1359
        %v1361 = vrcp.pop %v1360
        %v1362 = vmul.f32 %v1355, %v1361
        %v1363 = vsel %vm808, %v1362, 0.0
        %1364 = vadd.xlane.f32.xlu0 %v1363
        %v1365 = vpop.xlane.xlu0 %1364
        %v1366 = vrot.slane %v1365, 4
        %v1367 = vadd.f32 %v1365, %v1366
        %v1368 = vrot.slane %v1367, 2
        %v1369 = vadd.f32 %v1367, %v1368
        %v1370 = vrot.slane %v1369, 1
        %v1371 = vadd.f32 %v1369, %v1370
        %s1372 = vtos %v1371
        %s1373 = sadd.f32 %s819, %s1372
        %s1374 = scalar_lea.vmem %s216, 32 [#allocation2]
        %v1375 = vld [vmem:[%s1374] sm:$0xff]
        %v1376 = vld [vmem:[%s1374 + $0x8] sm:$0xff]
        %s1377 = scalar_lea.vmem %s225, 32 [#allocation4]
        %v1378 = vld [vmem:[%s1377] sm:$0xff]
        %v1379 = vld [vmem:[%s1377 + $0x8] sm:$0xff]
        %v1380 = vsub.f32 %v1375, %v1378
        %v1381 = vsub.f32 %v1376, %v1379
        %v1382 = vmul.f32 %v1380, %v1380
        %v1383 = vmul.f32 %v1381, %v1381
        %v1384 = vsel %vm271, %v1382, 0.0
        %v1385 = vsel %vm271, %v1383, 0.0
        %v1386 = vadd.f32 %v1384, %v1385
        %1387 = vadd.xlane.f32.xlu0 %v1386
        %v1388 = vpop.xlane.xlu0 %1387
        %v1389 = vrot.slane %v1388, 4
        %v1390 = vadd.f32 %v1388, %v1389
        %v1391 = vrot.slane %v1390, 2
        %v1392 = vadd.f32 %v1390, %v1391
        %v1393 = vrot.slane %v1392, 1
        %v1394 = vadd.f32 %v1392, %v1393
        %s1395 = vtos %v1394
        %s1396 = sadd.f32 %s842, %s1395
        %v1397 = vmul.f32 %v1375, %v1375
        %v1398 = vmul.f32 %v1376, %v1376
        %v1399 = vmul.f32 %v1378, %v1378
        %v1400 = vmul.f32 %v1379, %v1379
        %v1401 = vmul.f32 %v1375, %v1378
        %v1402 = vmul.f32 %v1376, %v1379
        %v1404 = vsel %vm271, %v1375, 0
        %v1407 = vsel %vm271, %v1376, 0
        %v1410 = vsel %vm271, %v1378, 0
        %v1413 = vsel %vm271, %v1379, 0
        %v1416 = vsel %vm271, %v1397, 0
        %v1419 = vsel %vm271, %v1398, 0
        %v1422 = vsel %vm271, %v1399, 0
        %v1425 = vsel %vm271, %v1400, 0
        %v1428 = vsel %vm271, %v1401, 0
        %v1431 = vsel %vm271, %v1402, 0
        %1433 = vmatprep.subr.mxu0 0.0
        %1434 = vmatpush1.msra.mxu0 %v260
        %1435 = vmatprep.subr.mxu0 0.0
        %1436 = vmatpush1.msra.mxu0 %v261
        %1437 = vmatprep.subr.mxu0 0.0
        %1438 = vmatpush1.msra.mxu0 0.0
        %1439 = vmatprep.subr.mxu0 0.0
        %1440 = vmatpush1.msra.mxu0 0.0
        %1441 = vmatprep.subr.mxu0 0.0
        %1442 = vmatpush1.msra.mxu0 0.0
        %1443 = vmatprep.subr.mxu0 0.0
        %1444 = vmatpush1.msra.mxu0 0.0
        %1445 = vmatprep.subr.mxu0 0.0
        %1446 = vmatpush1.msra.mxu0 0.0
        %1447 = vmatprep.subr.mxu0 0.0
        %1448 = vmatpush1.msra.mxu0 0.0
        %1449 = vmatprep.subr.mxu0 0.0
        %1450 = vmatpush1.msra.mxu0 0.0
        %1451 = vmatprep.subr.mxu0 0.0
        %1452 = vmatpush1.msra.mxu0 0.0
        %1453 = vmatprep.subr.mxu0 0.0
        %1454 = vmatpush1.msra.mxu0 0.0
        %1455 = vmatprep.subr.mxu0 0.0
        %1456 = vmatpush1.msra.mxu0 0.0
        %1457 = vmatprep.subr.mxu0 0.0
        %1458 = vmatpush1.msra.mxu0 0.0
        %1459 = vmatprep.subr.mxu0 0.0
        %1460 = vmatpush1.msra.mxu0 0.0
        %1461 = vmatprep.subr.mxu0 0.0
        %1462 = vmatpush1.msra.mxu0 0.0
        %1463 = vmatprep.subr.mxu0 0.0
        %1464 = vmatpush1.msra.mxu0 0.0
        %1465 = vmatprep.subr.mxu0 0.0
        %1466 = vmatpush1.msra.mxu0 0.0
        %1467 = vmatprep.subr.mxu0 0.0
        %1468 = vmatpush1.msra.mxu0 0.0
        %1469 = vmatprep.subr.mxu0 0.0
        %1470 = vmatpush1.msra.mxu0 0.0
        %1471 = vmatprep.subr.mxu0 0.0
        %1472 = vmatpush1.msra.mxu0 0.0
        %1473 = vmatprep.subr.mxu0 0.0
        %1474 = vmatpush1.msra.mxu0 0.0
        %1475 = vmatprep.subr.mxu0 0.0
        %1476 = vmatpush1.msra.mxu0 0.0
        %1477 = vmatprep.subr.mxu0 0.0
        %1478 = vmatpush1.msra.mxu0 0.0
        %1479 = vmatprep.subr.mxu0 0.0
        %1480 = vmatpush1.msra.mxu0 0.0
        %1481 = vmatprep.subr.mxu0 0.0
        %1482 = vmatpush1.msra.mxu0 0.0
        %1483 = vmatprep.subr.mxu0 0.0
        %1484 = vmatpush1.msra.mxu0 0.0
        %1485 = vmatprep.subr.mxu0 0.0
        %1486 = vmatpush1.msra.mxu0 0.0
        %1487 = vmatprep.subr.mxu0 0.0
        %1488 = vmatpush1.msra.mxu0 0.0
        %1489 = vmatprep.subr.mxu0 0.0
        %1490 = vmatpush1.msra.mxu0 0.0
        %1491 = vmatprep.subr.mxu0 0.0
        %1492 = vmatpush1.msra.mxu0 0.0
        %1493 = vmatprep.subr.mxu0 0.0
        %1494 = vmatpush1.msra.mxu0 0.0
        %1495 = vmatprep.subr.mxu0 0.0
        %1496 = vmatpush1.msra.mxu0 0.0
        %1497 = vmatprep.mubr.f32.mxu0 0.0
        %1498 = vmatmul.mubr.f32.gmra.mrb[0].mxu0 %v1404
        %v1499 = vpop.f32.mrb[0].mxu0
        %v1500 = vadd.f32 0.0, %v1499
        %v1501 = vpop.f32.mrb[0].mxu0
        %1502 = vmatprep.mubr.f32.mxu0 0.0
        %1503 = vmatmul.mubr.f32.gmra.mrb[0].mxu0 %v1407
        %v1504 = vpop.f32.mrb[0].mxu0
        %v1505 = vadd.f32 0.0, %v1504
        %v1506 = vpop.f32.mrb[0].mxu0
        %1507 = vmatprep.mubr.f32.mxu0 0.0
        %1508 = vmatmul.mubr.f32.gmra.mrb[0].mxu0 %v1410
        %v1509 = vpop.f32.mrb[0].mxu0
        %v1510 = vadd.f32 0.0, %v1509
        %v1511 = vpop.f32.mrb[0].mxu0
        %1512 = vmatprep.mubr.f32.mxu0 0.0
        %1513 = vmatmul.mubr.f32.gmra.mrb[0].mxu0 %v1413
        %v1514 = vpop.f32.mrb[0].mxu0
        %v1515 = vadd.f32 0.0, %v1514
        %v1516 = vpop.f32.mrb[0].mxu0
        %1517 = vmatprep.mubr.f32.mxu0 0.0
        %1518 = vmatmul.mubr.f32.gmra.mrb[0].mxu0 %v1416
        %v1519 = vpop.f32.mrb[0].mxu0
        %v1520 = vadd.f32 0.0, %v1519
        %v1521 = vpop.f32.mrb[0].mxu0
        %1522 = vmatprep.mubr.f32.mxu0 0.0
        %1523 = vmatmul.mubr.f32.gmra.mrb[0].mxu0 %v1419
        %v1524 = vpop.f32.mrb[0].mxu0
        %v1525 = vadd.f32 0.0, %v1524
        %v1526 = vpop.f32.mrb[0].mxu0
        %1527 = vmatprep.mubr.f32.mxu0 0.0
        %1528 = vmatmul.mubr.f32.gmra.mrb[0].mxu0 %v1422
        %v1529 = vpop.f32.mrb[0].mxu0
        %v1530 = vadd.f32 0.0, %v1529
        %v1531 = vpop.f32.mrb[0].mxu0
        %1532 = vmatprep.mubr.f32.mxu0 0.0
        %1533 = vmatmul.mubr.f32.gmra.mrb[0].mxu0 %v1425
        %v1534 = vpop.f32.mrb[0].mxu0
        %v1535 = vadd.f32 0.0, %v1534
        %v1536 = vpop.f32.mrb[0].mxu0
        %1537 = vmatprep.mubr.f32.mxu0 0.0
        %1538 = vmatmul.mubr.f32.gmra.mrb[0].mxu0 %v1428
        %v1539 = vpop.f32.mrb[0].mxu0
        %v1540 = vadd.f32 0.0, %v1539
        %v1541 = vpop.f32.mrb[0].mxu0
        %1542 = vmatprep.mubr.f32.mxu0 0.0
        %1543 = vmatmul.mubr.f32.gmra.mrb[0].mxu0 %v1431
        %v1544 = vpop.f32.mrb[0].mxu0
        %v1545 = vadd.f32 0.0, %v1544
        %v1546 = vpop.f32.mrb[0].mxu0
        %1547 = vdwg.mxu0
        %1548 = vmatprep.subr.mxu0 0.0
        %1549 = vmatpush1.msra.mxu0 %v1500
        %1550 = vmatprep.subr.mxu0 0.0
        %1551 = vmatpush1.msra.mxu0 %v1505
        %1552 = vmatprep.subr.mxu0 0.0
        %1553 = vmatpush1.msra.mxu0 0.0
        %1554 = vmatprep.subr.mxu0 0.0
        %1555 = vmatpush1.msra.mxu0 0.0
        %1556 = vmatprep.subr.mxu0 0.0
        %1557 = vmatpush1.msra.mxu0 0.0
        %1558 = vmatprep.subr.mxu0 0.0
        %1559 = vmatpush1.msra.mxu0 0.0
        %1560 = vmatprep.subr.mxu0 0.0
        %1561 = vmatpush1.msra.mxu0 0.0
        %1562 = vmatprep.subr.mxu0 0.0
        %1563 = vmatpush1.msra.mxu0 0.0
        %1564 = vmatprep.subr.mxu0 0.0
        %1565 = vmatpush1.msra.mxu0 0.0
        %1566 = vmatprep.subr.mxu0 0.0
        %1567 = vmatpush1.msra.mxu0 0.0
        %1568 = vmatprep.subr.mxu0 0.0
        %1569 = vmatpush1.msra.mxu0 0.0
        %1570 = vmatprep.subr.mxu0 0.0
        %1571 = vmatpush1.msra.mxu0 0.0
        %1572 = vmatprep.subr.mxu0 0.0
        %1573 = vmatpush1.msra.mxu0 0.0
        %1574 = vmatprep.subr.mxu0 0.0
        %1575 = vmatpush1.msra.mxu0 0.0
        %1576 = vmatprep.subr.mxu0 0.0
        %1577 = vmatpush1.msra.mxu0 0.0
        %1578 = vmatprep.subr.mxu0 0.0
        %1579 = vmatpush1.msra.mxu0 0.0
        %1580 = vmatprep.subr.mxu0 0.0
        %1581 = vmatpush1.msra.mxu0 0.0
        %1582 = vmatprep.subr.mxu0 0.0
        %1583 = vmatpush1.msra.mxu0 0.0
        %1584 = vmatprep.subr.mxu0 0.0
        %1585 = vmatpush1.msra.mxu0 0.0
        %1586 = vmatprep.subr.mxu0 0.0
        %1587 = vmatpush1.msra.mxu0 0.0
        %1588 = vmatprep.subr.mxu0 0.0
        %1589 = vmatpush1.msra.mxu0 0.0
        %1590 = vmatprep.subr.mxu0 0.0
        %1591 = vmatpush1.msra.mxu0 0.0
        %1592 = vmatprep.subr.mxu0 0.0
        %1593 = vmatpush1.msra.mxu0 0.0
        %1594 = vmatprep.subr.mxu0 0.0
        %1595 = vmatpush1.msra.mxu0 0.0
        %1596 = vmatprep.subr.mxu0 0.0
        %1597 = vmatpush1.msra.mxu0 0.0
        %1598 = vmatprep.subr.mxu0 0.0
        %1599 = vmatpush1.msra.mxu0 0.0
        %1600 = vmatprep.subr.mxu0 0.0
        %1601 = vmatpush1.msra.mxu0 0.0
        %1602 = vmatprep.subr.mxu0 0.0
        %1603 = vmatpush1.msra.mxu0 0.0
        %1604 = vmatprep.subr.mxu0 0.0
        %1605 = vmatpush1.msra.mxu0 0.0
        %1606 = vmatprep.subr.mxu0 0.0
        %1607 = vmatpush1.msra.mxu0 0.0
        %1608 = vmatprep.subr.mxu0 0.0
        %1609 = vmatpush1.msra.mxu0 0.0
        %1610 = vmatprep.subr.mxu0 0.0
        %1611 = vmatpush1.msra.mxu0 0.0
        %1612 = vmatprep.mubr.f32.mxu0 0.0
        %1613 = vmatmul.mubr.f32.gmra.mrb[0].mxu0 %v437
        %v1614 = vpop.f32.mrb[0].mxu0
        %v1615 = vadd.f32 0.0, %v1614
        %v1616 = vpop.f32.mrb[0].mxu0
        %1617 = vdwg.mxu0
        %1618 = vmatprep.subr.mxu0 0.0
        %1619 = vmatpush1.msra.mxu0 %v1510
        %1620 = vmatprep.subr.mxu0 0.0
        %1621 = vmatpush1.msra.mxu0 %v1515
        %1622 = vmatprep.subr.mxu0 0.0
        %1623 = vmatpush1.msra.mxu0 0.0
        %1624 = vmatprep.subr.mxu0 0.0
        %1625 = vmatpush1.msra.mxu0 0.0
        %1626 = vmatprep.subr.mxu0 0.0
        %1627 = vmatpush1.msra.mxu0 0.0
        %1628 = vmatprep.subr.mxu0 0.0
        %1629 = vmatpush1.msra.mxu0 0.0
        %1630 = vmatprep.subr.mxu0 0.0
        %1631 = vmatpush1.msra.mxu0 0.0
        %1632 = vmatprep.subr.mxu0 0.0
        %1633 = vmatpush1.msra.mxu0 0.0
        %1634 = vmatprep.subr.mxu0 0.0
        %1635 = vmatpush1.msra.mxu0 0.0
        %1636 = vmatprep.subr.mxu0 0.0
        %1637 = vmatpush1.msra.mxu0 0.0
        %1638 = vmatprep.subr.mxu0 0.0
        %1639 = vmatpush1.msra.mxu0 0.0
        %1640 = vmatprep.subr.mxu0 0.0
        %1641 = vmatpush1.msra.mxu0 0.0
        %1642 = vmatprep.subr.mxu0 0.0
        %1643 = vmatpush1.msra.mxu0 0.0
        %1644 = vmatprep.subr.mxu0 0.0
        %1645 = vmatpush1.msra.mxu0 0.0
        %1646 = vmatprep.subr.mxu0 0.0
        %1647 = vmatpush1.msra.mxu0 0.0
        %1648 = vmatprep.subr.mxu0 0.0
        %1649 = vmatpush1.msra.mxu0 0.0
        %1650 = vmatprep.subr.mxu0 0.0
        %1651 = vmatpush1.msra.mxu0 0.0
        %1652 = vmatprep.subr.mxu0 0.0
        %1653 = vmatpush1.msra.mxu0 0.0
        %1654 = vmatprep.subr.mxu0 0.0
        %1655 = vmatpush1.msra.mxu0 0.0
        %1656 = vmatprep.subr.mxu0 0.0
        %1657 = vmatpush1.msra.mxu0 0.0
        %1658 = vmatprep.subr.mxu0 0.0
        %1659 = vmatpush1.msra.mxu0 0.0
        %1660 = vmatprep.subr.mxu0 0.0
        %1661 = vmatpush1.msra.mxu0 0.0
        %1662 = vmatprep.subr.mxu0 0.0
        %1663 = vmatpush1.msra.mxu0 0.0
        %1664 = vmatprep.subr.mxu0 0.0
        %1665 = vmatpush1.msra.mxu0 0.0
        %1666 = vmatprep.subr.mxu0 0.0
        %1667 = vmatpush1.msra.mxu0 0.0
        %1668 = vmatprep.subr.mxu0 0.0
        %1669 = vmatpush1.msra.mxu0 0.0
        %1670 = vmatprep.subr.mxu0 0.0
        %1671 = vmatpush1.msra.mxu0 0.0
        %1672 = vmatprep.subr.mxu0 0.0
        %1673 = vmatpush1.msra.mxu0 0.0
        %1674 = vmatprep.subr.mxu0 0.0
        %1675 = vmatpush1.msra.mxu0 0.0
        %1676 = vmatprep.subr.mxu0 0.0
        %1677 = vmatpush1.msra.mxu0 0.0
        %1678 = vmatprep.subr.mxu0 0.0
        %1679 = vmatpush1.msra.mxu0 0.0
        %1680 = vmatprep.subr.mxu0 0.0
        %1681 = vmatpush1.msra.mxu0 0.0
        %1682 = vmatprep.mubr.f32.mxu0 0.0
        %1683 = vmatmul.mubr.f32.gmra.mrb[0].mxu0 %v437
        %v1684 = vpop.f32.mrb[0].mxu0
        %v1685 = vadd.f32 0.0, %v1684
        %v1686 = vpop.f32.mrb[0].mxu0
        %1687 = vdwg.mxu0
        %1688 = vmatprep.subr.mxu0 0.0
        %1689 = vmatpush1.msra.mxu0 %v1520
        %1690 = vmatprep.subr.mxu0 0.0
        %1691 = vmatpush1.msra.mxu0 %v1525
        %1692 = vmatprep.subr.mxu0 0.0
        %1693 = vmatpush1.msra.mxu0 0.0
        %1694 = vmatprep.subr.mxu0 0.0
        %1695 = vmatpush1.msra.mxu0 0.0
        %1696 = vmatprep.subr.mxu0 0.0
        %1697 = vmatpush1.msra.mxu0 0.0
        %1698 = vmatprep.subr.mxu0 0.0
        %1699 = vmatpush1.msra.mxu0 0.0
        %1700 = vmatprep.subr.mxu0 0.0
        %1701 = vmatpush1.msra.mxu0 0.0
        %1702 = vmatprep.subr.mxu0 0.0
        %1703 = vmatpush1.msra.mxu0 0.0
        %1704 = vmatprep.subr.mxu0 0.0
        %1705 = vmatpush1.msra.mxu0 0.0
        %1706 = vmatprep.subr.mxu0 0.0
        %1707 = vmatpush1.msra.mxu0 0.0
        %1708 = vmatprep.subr.mxu0 0.0
        %1709 = vmatpush1.msra.mxu0 0.0
        %1710 = vmatprep.subr.mxu0 0.0
        %1711 = vmatpush1.msra.mxu0 0.0
        %1712 = vmatprep.subr.mxu0 0.0
        %1713 = vmatpush1.msra.mxu0 0.0
        %1714 = vmatprep.subr.mxu0 0.0
        %1715 = vmatpush1.msra.mxu0 0.0
        %1716 = vmatprep.subr.mxu0 0.0
        %1717 = vmatpush1.msra.mxu0 0.0
        %1718 = vmatprep.subr.mxu0 0.0
        %1719 = vmatpush1.msra.mxu0 0.0
        %1720 = vmatprep.subr.mxu0 0.0
        %1721 = vmatpush1.msra.mxu0 0.0
        %1722 = vmatprep.subr.mxu0 0.0
        %1723 = vmatpush1.msra.mxu0 0.0
        %1724 = vmatprep.subr.mxu0 0.0
        %1725 = vmatpush1.msra.mxu0 0.0
        %1726 = vmatprep.subr.mxu0 0.0
        %1727 = vmatpush1.msra.mxu0 0.0
        %1728 = vmatprep.subr.mxu0 0.0
        %1729 = vmatpush1.msra.mxu0 0.0
        %1730 = vmatprep.subr.mxu0 0.0
        %1731 = vmatpush1.msra.mxu0 0.0
        %1732 = vmatprep.subr.mxu0 0.0
        %1733 = vmatpush1.msra.mxu0 0.0
        %1734 = vmatprep.subr.mxu0 0.0
        %1735 = vmatpush1.msra.mxu0 0.0
        %1736 = vmatprep.subr.mxu0 0.0
        %1737 = vmatpush1.msra.mxu0 0.0
        %1738 = vmatprep.subr.mxu0 0.0
        %1739 = vmatpush1.msra.mxu0 0.0
        %1740 = vmatprep.subr.mxu0 0.0
        %1741 = vmatpush1.msra.mxu0 0.0
        %1742 = vmatprep.subr.mxu0 0.0
        %1743 = vmatpush1.msra.mxu0 0.0
        %1744 = vmatprep.subr.mxu0 0.0
        %1745 = vmatpush1.msra.mxu0 0.0
        %1746 = vmatprep.subr.mxu0 0.0
        %1747 = vmatpush1.msra.mxu0 0.0
        %1748 = vmatprep.subr.mxu0 0.0
        %1749 = vmatpush1.msra.mxu0 0.0
        %1750 = vmatprep.subr.mxu0 0.0
        %1751 = vmatpush1.msra.mxu0 0.0
        %1752 = vmatprep.mubr.f32.mxu0 0.0
        %1753 = vmatmul.mubr.f32.gmra.mrb[0].mxu0 %v437
        %v1754 = vpop.f32.mrb[0].mxu0
        %v1755 = vadd.f32 0.0, %v1754
        %v1756 = vpop.f32.mrb[0].mxu0
        %1757 = vdwg.mxu0
        %1758 = vmatprep.subr.mxu0 0.0
        %1759 = vmatpush1.msra.mxu0 %v1530
        %1760 = vmatprep.subr.mxu0 0.0
        %1761 = vmatpush1.msra.mxu0 %v1535
        %1762 = vmatprep.subr.mxu0 0.0
        %1763 = vmatpush1.msra.mxu0 0.0
        %1764 = vmatprep.subr.mxu0 0.0
        %1765 = vmatpush1.msra.mxu0 0.0
        %1766 = vmatprep.subr.mxu0 0.0
        %1767 = vmatpush1.msra.mxu0 0.0
        %1768 = vmatprep.subr.mxu0 0.0
        %1769 = vmatpush1.msra.mxu0 0.0
        %1770 = vmatprep.subr.mxu0 0.0
        %1771 = vmatpush1.msra.mxu0 0.0
        %1772 = vmatprep.subr.mxu0 0.0
        %1773 = vmatpush1.msra.mxu0 0.0
        %1774 = vmatprep.subr.mxu0 0.0
        %1775 = vmatpush1.msra.mxu0 0.0
        %1776 = vmatprep.subr.mxu0 0.0
        %1777 = vmatpush1.msra.mxu0 0.0
        %1778 = vmatprep.subr.mxu0 0.0
        %1779 = vmatpush1.msra.mxu0 0.0
        %1780 = vmatprep.subr.mxu0 0.0
        %1781 = vmatpush1.msra.mxu0 0.0
        %1782 = vmatprep.subr.mxu0 0.0
        %1783 = vmatpush1.msra.mxu0 0.0
        %1784 = vmatprep.subr.mxu0 0.0
        %1785 = vmatpush1.msra.mxu0 0.0
        %1786 = vmatprep.subr.mxu0 0.0
        %1787 = vmatpush1.msra.mxu0 0.0
        %1788 = vmatprep.subr.mxu0 0.0
        %1789 = vmatpush1.msra.mxu0 0.0
        %1790 = vmatprep.subr.mxu0 0.0
        %1791 = vmatpush1.msra.mxu0 0.0
        %1792 = vmatprep.subr.mxu0 0.0
        %1793 = vmatpush1.msra.mxu0 0.0
        %1794 = vmatprep.subr.mxu0 0.0
        %1795 = vmatpush1.msra.mxu0 0.0
        %1796 = vmatprep.subr.mxu0 0.0
        %1797 = vmatpush1.msra.mxu0 0.0
        %1798 = vmatprep.subr.mxu0 0.0
        %1799 = vmatpush1.msra.mxu0 0.0
        %1800 = vmatprep.subr.mxu0 0.0
        %1801 = vmatpush1.msra.mxu0 0.0
        %1802 = vmatprep.subr.mxu0 0.0
        %1803 = vmatpush1.msra.mxu0 0.0
        %1804 = vmatprep.subr.mxu0 0.0
        %1805 = vmatpush1.msra.mxu0 0.0
        %1806 = vmatprep.subr.mxu0 0.0
        %1807 = vmatpush1.msra.mxu0 0.0
        %1808 = vmatprep.subr.mxu0 0.0
        %1809 = vmatpush1.msra.mxu0 0.0
        %1810 = vmatprep.subr.mxu0 0.0
        %1811 = vmatpush1.msra.mxu0 0.0
        %1812 = vmatprep.subr.mxu0 0.0
        %1813 = vmatpush1.msra.mxu0 0.0
        %1814 = vmatprep.subr.mxu0 0.0
        %1815 = vmatpush1.msra.mxu0 0.0
        %1816 = vmatprep.subr.mxu0 0.0
        %1817 = vmatpush1.msra.mxu0 0.0
        %1818 = vmatprep.subr.mxu0 0.0
        %1819 = vmatpush1.msra.mxu0 0.0
        %1820 = vmatprep.subr.mxu0 0.0
        %1821 = vmatpush1.msra.mxu0 0.0
        %1822 = vmatprep.mubr.f32.mxu0 0.0
        %1823 = vmatmul.mubr.f32.gmra.mrb[0].mxu0 %v437
        %v1824 = vpop.f32.mrb[0].mxu0
        %v1825 = vadd.f32 0.0, %v1824
        %v1826 = vpop.f32.mrb[0].mxu0
        %1827 = vdwg.mxu0
        %1828 = vmatprep.subr.mxu0 0.0
        %1829 = vmatpush1.msra.mxu0 %v1540
        %1830 = vmatprep.subr.mxu0 0.0
        %1831 = vmatpush1.msra.mxu0 %v1545
        %1832 = vmatprep.subr.mxu0 0.0
        %1833 = vmatpush1.msra.mxu0 0.0
        %1834 = vmatprep.subr.mxu0 0.0
        %1835 = vmatpush1.msra.mxu0 0.0
        %1836 = vmatprep.subr.mxu0 0.0
        %1837 = vmatpush1.msra.mxu0 0.0
        %1838 = vmatprep.subr.mxu0 0.0
        %1839 = vmatpush1.msra.mxu0 0.0
        %1840 = vmatprep.subr.mxu0 0.0
        %1841 = vmatpush1.msra.mxu0 0.0
        %1842 = vmatprep.subr.mxu0 0.0
        %1843 = vmatpush1.msra.mxu0 0.0
        %1844 = vmatprep.subr.mxu0 0.0
        %1845 = vmatpush1.msra.mxu0 0.0
        %1846 = vmatprep.subr.mxu0 0.0
        %1847 = vmatpush1.msra.mxu0 0.0
        %1848 = vmatprep.subr.mxu0 0.0
        %1849 = vmatpush1.msra.mxu0 0.0
        %1850 = vmatprep.subr.mxu0 0.0
        %1851 = vmatpush1.msra.mxu0 0.0
        %1852 = vmatprep.subr.mxu0 0.0
        %1853 = vmatpush1.msra.mxu0 0.0
        %1854 = vmatprep.subr.mxu0 0.0
        %1855 = vmatpush1.msra.mxu0 0.0
        %1856 = vmatprep.subr.mxu0 0.0
        %1857 = vmatpush1.msra.mxu0 0.0
        %1858 = vmatprep.subr.mxu0 0.0
        %1859 = vmatpush1.msra.mxu0 0.0
        %1860 = vmatprep.subr.mxu0 0.0
        %1861 = vmatpush1.msra.mxu0 0.0
        %1862 = vmatprep.subr.mxu0 0.0
        %1863 = vmatpush1.msra.mxu0 0.0
        %1864 = vmatprep.subr.mxu0 0.0
        %1865 = vmatpush1.msra.mxu0 0.0
        %1866 = vmatprep.subr.mxu0 0.0
        %1867 = vmatpush1.msra.mxu0 0.0
        %1868 = vmatprep.subr.mxu0 0.0
        %1869 = vmatpush1.msra.mxu0 0.0
        %1870 = vmatprep.subr.mxu0 0.0
        %1871 = vmatpush1.msra.mxu0 0.0
        %1872 = vmatprep.subr.mxu0 0.0
        %1873 = vmatpush1.msra.mxu0 0.0
        %1874 = vmatprep.subr.mxu0 0.0
        %1875 = vmatpush1.msra.mxu0 0.0
        %1876 = vmatprep.subr.mxu0 0.0
        %1877 = vmatpush1.msra.mxu0 0.0
        %1878 = vmatprep.subr.mxu0 0.0
        %1879 = vmatpush1.msra.mxu0 0.0
        %1880 = vmatprep.subr.mxu0 0.0
        %1881 = vmatpush1.msra.mxu0 0.0
        %1882 = vmatprep.subr.mxu0 0.0
        %1883 = vmatpush1.msra.mxu0 0.0
        %1884 = vmatprep.subr.mxu0 0.0
        %1885 = vmatpush1.msra.mxu0 0.0
        %1886 = vmatprep.subr.mxu0 0.0
        %1887 = vmatpush1.msra.mxu0 0.0
        %1888 = vmatprep.subr.mxu0 0.0
        %1889 = vmatpush1.msra.mxu0 0.0
        %1890 = vmatprep.subr.mxu0 0.0
        %1891 = vmatpush1.msra.mxu0 0.0
        %1892 = vmatprep.mubr.f32.mxu0 0.0
        %1893 = vmatmul.mubr.f32.gmra.mrb[0].mxu0 %v437
        %v1894 = vpop.f32.mrb[0].mxu0
        %v1895 = vadd.f32 0.0, %v1894
        %v1896 = vpop.f32.mrb[0].mxu0
        %1897 = vdwg.mxu0
        %v1898 = vmul.f32 %v1615, %v1615
        %v1899 = vsub.f32 %v1755, %v1898
        %v1900 = vmul.f32 %v1685, %v1685
        %v1901 = vsub.f32 %v1825, %v1900
        %v1902 = vmul.f32 %v1615, %v1685
        %v1903 = vsub.f32 %v1895, %v1902
        %v1904 = vmul.f32 %v1615, 2.0
        %v1905 = vmul.f32 %v1904, %v1685
        %v1906 = vadd.f32 %v1905, 0.0001
        %v1907 = vmul.f32 %v1903, 2.0
        %v1908 = vadd.f32 %v1907, 0.0009
        %v1909 = vmul.f32 %v1906, %v1908
        %v1910 = vadd.f32 %v1898, %v1900
        %v1911 = vadd.f32 %v1910, 0.0001
        %v1912 = vadd.f32 %v1899, %v1901
        %v1913 = vadd.f32 %v1912, 0.0009
        %v1914 = vmul.f32 %v1911, %v1913
        %v1915 = vrcp.pop %v1914
        %v1916 = vmul.f32 %v1909, %v1915
        %v1917 = vsel %vm808, %v1916, 0.0
        %1918 = vadd.xlane.f32.xlu0 %v1917
        %v1919 = vpop.xlane.xlu0 %1918
        %v1920 = vrot.slane %v1919, 4
        %v1921 = vadd.f32 %v1919, %v1920
        %v1922 = vrot.slane %v1921, 2
        %v1923 = vadd.f32 %v1921, %v1922
        %v1924 = vrot.slane %v1923, 1
        %v1925 = vadd.f32 %v1923, %v1924
        %s1926 = vtos %v1925
        %s1927 = sadd.f32 %s1373, %s1926
        %s1928 = scalar_lea.vmem %s216, 48 [#allocation2]
        %v1929 = vld [vmem:[%s1928] sm:$0xff]
        %v1930 = vld [vmem:[%s1928 + $0x8] sm:$0xff]
        %s1931 = scalar_lea.vmem %s225, 48 [#allocation4]
        %v1932 = vld [vmem:[%s1931] sm:$0xff]
        %v1933 = vld [vmem:[%s1931 + $0x8] sm:$0xff]
        %v1934 = vsub.f32 %v1929, %v1932
        %v1935 = vsub.f32 %v1930, %v1933
        %v1936 = vmul.f32 %v1934, %v1934
        %v1937 = vmul.f32 %v1935, %v1935
        %v1938 = vsel %vm271, %v1936, 0.0
        %v1939 = vsel %vm271, %v1937, 0.0
        %v1940 = vadd.f32 %v1938, %v1939
        %1941 = vadd.xlane.f32.xlu0 %v1940
        %v1942 = vpop.xlane.xlu0 %1941
        %v1943 = vrot.slane %v1942, 4
        %v1944 = vadd.f32 %v1942, %v1943
        %v1945 = vrot.slane %v1944, 2
        %v1946 = vadd.f32 %v1944, %v1945
        %v1947 = vrot.slane %v1946, 1
        %v1948 = vadd.f32 %v1946, %v1947
        %s1949 = vtos %v1948
        %s1950 = sadd.f32 %s1396, %s1949
        %v1951 = vmul.f32 %v1929, %v1929
        %v1952 = vmul.f32 %v1930, %v1930
        %v1953 = vmul.f32 %v1932, %v1932
        %v1954 = vmul.f32 %v1933, %v1933
        %v1955 = vmul.f32 %v1929, %v1932
        %v1956 = vmul.f32 %v1930, %v1933
        %v1958 = vsel %vm271, %v1929, 0
        %v1961 = vsel %vm271, %v1930, 0
        %v1964 = vsel %vm271, %v1932, 0
        %v1967 = vsel %vm271, %v1933, 0
        %v1970 = vsel %vm271, %v1951, 0
        %v1973 = vsel %vm271, %v1952, 0
        %v1976 = vsel %vm271, %v1953, 0
        %v1979 = vsel %vm271, %v1954, 0
        %v1982 = vsel %vm271, %v1955, 0
        %v1985 = vsel %vm271, %v1956, 0
        %1987 = vmatprep.subr.mxu0 0.0
        %1988 = vmatpush1.msra.mxu0 %v260
        %1989 = vmatprep.subr.mxu0 0.0
        %1990 = vmatpush1.msra.mxu0 %v261
        %1991 = vmatprep.subr.mxu0 0.0
        %1992 = vmatpush1.msra.mxu0 0.0
        %1993 = vmatprep.subr.mxu0 0.0
        %1994 = vmatpush1.msra.mxu0 0.0
        %1995 = vmatprep.subr.mxu0 0.0
        %1996 = vmatpush1.msra.mxu0 0.0
        %1997 = vmatprep.subr.mxu0 0.0
        %1998 = vmatpush1.msra.mxu0 0.0
        %1999 = vmatprep.subr.mxu0 0.0
        %2000 = vmatpush1.msra.mxu0 0.0
        %2001 = vmatprep.subr.mxu0 0.0
        %2002 = vmatpush1.msra.mxu0 0.0
        %2003 = vmatprep.subr.mxu0 0.0
        %2004 = vmatpush1.msra.mxu0 0.0
        %2005 = vmatprep.subr.mxu0 0.0
        %2006 = vmatpush1.msra.mxu0 0.0
        %2007 = vmatprep.subr.mxu0 0.0
        %2008 = vmatpush1.msra.mxu0 0.0
        %2009 = vmatprep.subr.mxu0 0.0
        %2010 = vmatpush1.msra.mxu0 0.0
        %2011 = vmatprep.subr.mxu0 0.0
        %2012 = vmatpush1.msra.mxu0 0.0
        %2013 = vmatprep.subr.mxu0 0.0
        %2014 = vmatpush1.msra.mxu0 0.0
        %2015 = vmatprep.subr.mxu0 0.0
        %2016 = vmatpush1.msra.mxu0 0.0
        %2017 = vmatprep.subr.mxu0 0.0
        %2018 = vmatpush1.msra.mxu0 0.0
        %2019 = vmatprep.subr.mxu0 0.0
        %2020 = vmatpush1.msra.mxu0 0.0
        %2021 = vmatprep.subr.mxu0 0.0
        %2022 = vmatpush1.msra.mxu0 0.0
        %2023 = vmatprep.subr.mxu0 0.0
        %2024 = vmatpush1.msra.mxu0 0.0
        %2025 = vmatprep.subr.mxu0 0.0
        %2026 = vmatpush1.msra.mxu0 0.0
        %2027 = vmatprep.subr.mxu0 0.0
        %2028 = vmatpush1.msra.mxu0 0.0
        %2029 = vmatprep.subr.mxu0 0.0
        %2030 = vmatpush1.msra.mxu0 0.0
        %2031 = vmatprep.subr.mxu0 0.0
        %2032 = vmatpush1.msra.mxu0 0.0
        %2033 = vmatprep.subr.mxu0 0.0
        %2034 = vmatpush1.msra.mxu0 0.0
        %2035 = vmatprep.subr.mxu0 0.0
        %2036 = vmatpush1.msra.mxu0 0.0
        %2037 = vmatprep.subr.mxu0 0.0
        %2038 = vmatpush1.msra.mxu0 0.0
        %2039 = vmatprep.subr.mxu0 0.0
        %2040 = vmatpush1.msra.mxu0 0.0
        %2041 = vmatprep.subr.mxu0 0.0
        %2042 = vmatpush1.msra.mxu0 0.0
        %2043 = vmatprep.subr.mxu0 0.0
        %2044 = vmatpush1.msra.mxu0 0.0
        %2045 = vmatprep.subr.mxu0 0.0
        %2046 = vmatpush1.msra.mxu0 0.0
        %2047 = vmatprep.subr.mxu0 0.0
        %2048 = vmatpush1.msra.mxu0 0.0
        %2049 = vmatprep.subr.mxu0 0.0
        %2050 = vmatpush1.msra.mxu0 0.0
        %2051 = vmatprep.mubr.f32.mxu0 0.0
        %2052 = vmatmul.mubr.f32.gmra.mrb[0].mxu0 %v1958
        %v2053 = vpop.f32.mrb[0].mxu0
        %v2054 = vadd.f32 0.0, %v2053
        %v2055 = vpop.f32.mrb[0].mxu0
        %2056 = vmatprep.mubr.f32.mxu0 0.0
        %2057 = vmatmul.mubr.f32.gmra.mrb[0].mxu0 %v1961
        %v2058 = vpop.f32.mrb[0].mxu0
        %v2059 = vadd.f32 0.0, %v2058
        %v2060 = vpop.f32.mrb[0].mxu0
        %2061 = vmatprep.mubr.f32.mxu0 0.0
        %2062 = vmatmul.mubr.f32.gmra.mrb[0].mxu0 %v1964
        %v2063 = vpop.f32.mrb[0].mxu0
        %v2064 = vadd.f32 0.0, %v2063
        %v2065 = vpop.f32.mrb[0].mxu0
        %2066 = vmatprep.mubr.f32.mxu0 0.0
        %2067 = vmatmul.mubr.f32.gmra.mrb[0].mxu0 %v1967
        %v2068 = vpop.f32.mrb[0].mxu0
        %v2069 = vadd.f32 0.0, %v2068
        %v2070 = vpop.f32.mrb[0].mxu0
        %2071 = vmatprep.mubr.f32.mxu0 0.0
        %2072 = vmatmul.mubr.f32.gmra.mrb[0].mxu0 %v1970
        %v2073 = vpop.f32.mrb[0].mxu0
        %v2074 = vadd.f32 0.0, %v2073
        %v2075 = vpop.f32.mrb[0].mxu0
        %2076 = vmatprep.mubr.f32.mxu0 0.0
        %2077 = vmatmul.mubr.f32.gmra.mrb[0].mxu0 %v1973
        %v2078 = vpop.f32.mrb[0].mxu0
        %v2079 = vadd.f32 0.0, %v2078
        %v2080 = vpop.f32.mrb[0].mxu0
        %2081 = vmatprep.mubr.f32.mxu0 0.0
        %2082 = vmatmul.mubr.f32.gmra.mrb[0].mxu0 %v1976
        %v2083 = vpop.f32.mrb[0].mxu0
        %v2084 = vadd.f32 0.0, %v2083
        %v2085 = vpop.f32.mrb[0].mxu0
        %2086 = vmatprep.mubr.f32.mxu0 0.0
        %2087 = vmatmul.mubr.f32.gmra.mrb[0].mxu0 %v1979
        %v2088 = vpop.f32.mrb[0].mxu0
        %v2089 = vadd.f32 0.0, %v2088
        %v2090 = vpop.f32.mrb[0].mxu0
        %2091 = vmatprep.mubr.f32.mxu0 0.0
        %2092 = vmatmul.mubr.f32.gmra.mrb[0].mxu0 %v1982
        %v2093 = vpop.f32.mrb[0].mxu0
        %v2094 = vadd.f32 0.0, %v2093
        %v2095 = vpop.f32.mrb[0].mxu0
        %2096 = vmatprep.mubr.f32.mxu0 0.0
        %2097 = vmatmul.mubr.f32.gmra.mrb[0].mxu0 %v1985
        %v2098 = vpop.f32.mrb[0].mxu0
        %v2099 = vadd.f32 0.0, %v2098
        %v2100 = vpop.f32.mrb[0].mxu0
        %2101 = vdwg.mxu0
        %2102 = vmatprep.subr.mxu0 0.0
        %2103 = vmatpush1.msra.mxu0 %v2054
        %2104 = vmatprep.subr.mxu0 0.0
        %2105 = vmatpush1.msra.mxu0 %v2059
        %2106 = vmatprep.subr.mxu0 0.0
        %2107 = vmatpush1.msra.mxu0 0.0
        %2108 = vmatprep.subr.mxu0 0.0
        %2109 = vmatpush1.msra.mxu0 0.0
        %2110 = vmatprep.subr.mxu0 0.0
        %2111 = vmatpush1.msra.mxu0 0.0
        %2112 = vmatprep.subr.mxu0 0.0
        %2113 = vmatpush1.msra.mxu0 0.0
        %2114 = vmatprep.subr.mxu0 0.0
        %2115 = vmatpush1.msra.mxu0 0.0
        %2116 = vmatprep.subr.mxu0 0.0
        %2117 = vmatpush1.msra.mxu0 0.0
        %2118 = vmatprep.subr.mxu0 0.0
        %2119 = vmatpush1.msra.mxu0 0.0
        %2120 = vmatprep.subr.mxu0 0.0
        %2121 = vmatpush1.msra.mxu0 0.0
        %2122 = vmatprep.subr.mxu0 0.0
        %2123 = vmatpush1.msra.mxu0 0.0
        %2124 = vmatprep.subr.mxu0 0.0
        %2125 = vmatpush1.msra.mxu0 0.0
        %2126 = vmatprep.subr.mxu0 0.0
        %2127 = vmatpush1.msra.mxu0 0.0
        %2128 = vmatprep.subr.mxu0 0.0
        %2129 = vmatpush1.msra.mxu0 0.0
        %2130 = vmatprep.subr.mxu0 0.0
        %2131 = vmatpush1.msra.mxu0 0.0
        %2132 = vmatprep.subr.mxu0 0.0
        %2133 = vmatpush1.msra.mxu0 0.0
        %2134 = vmatprep.subr.mxu0 0.0
        %2135 = vmatpush1.msra.mxu0 0.0
        %2136 = vmatprep.subr.mxu0 0.0
        %2137 = vmatpush1.msra.mxu0 0.0
        %2138 = vmatprep.subr.mxu0 0.0
        %2139 = vmatpush1.msra.mxu0 0.0
        %2140 = vmatprep.subr.mxu0 0.0
        %2141 = vmatpush1.msra.mxu0 0.0
        %2142 = vmatprep.subr.mxu0 0.0
        %2143 = vmatpush1.msra.mxu0 0.0
        %2144 = vmatprep.subr.mxu0 0.0
        %2145 = vmatpush1.msra.mxu0 0.0
        %2146 = vmatprep.subr.mxu0 0.0
        %2147 = vmatpush1.msra.mxu0 0.0
        %2148 = vmatprep.subr.mxu0 0.0
        %2149 = vmatpush1.msra.mxu0 0.0
        %2150 = vmatprep.subr.mxu0 0.0
        %2151 = vmatpush1.msra.mxu0 0.0
        %2152 = vmatprep.subr.mxu0 0.0
        %2153 = vmatpush1.msra.mxu0 0.0
        %2154 = vmatprep.subr.mxu0 0.0
        %2155 = vmatpush1.msra.mxu0 0.0
        %2156 = vmatprep.subr.mxu0 0.0
        %2157 = vmatpush1.msra.mxu0 0.0
        %2158 = vmatprep.subr.mxu0 0.0
        %2159 = vmatpush1.msra.mxu0 0.0
        %2160 = vmatprep.subr.mxu0 0.0
        %2161 = vmatpush1.msra.mxu0 0.0
        %2162 = vmatprep.subr.mxu0 0.0
        %2163 = vmatpush1.msra.mxu0 0.0
        %2164 = vmatprep.subr.mxu0 0.0
        %2165 = vmatpush1.msra.mxu0 0.0
        %2166 = vmatprep.mubr.f32.mxu0 0.0
        %2167 = vmatmul.mubr.f32.gmra.mrb[0].mxu0 %v437
        %v2168 = vpop.f32.mrb[0].mxu0
        %v2169 = vadd.f32 0.0, %v2168
        %v2170 = vpop.f32.mrb[0].mxu0
        %2171 = vdwg.mxu0
        %2172 = vmatprep.subr.mxu0 0.0
        %2173 = vmatpush1.msra.mxu0 %v2064
        %2174 = vmatprep.subr.mxu0 0.0
        %2175 = vmatpush1.msra.mxu0 %v2069
        %2176 = vmatprep.subr.mxu0 0.0
        %2177 = vmatpush1.msra.mxu0 0.0
        %2178 = vmatprep.subr.mxu0 0.0
        %2179 = vmatpush1.msra.mxu0 0.0
        %2180 = vmatprep.subr.mxu0 0.0
        %2181 = vmatpush1.msra.mxu0 0.0
        %2182 = vmatprep.subr.mxu0 0.0
        %2183 = vmatpush1.msra.mxu0 0.0
        %2184 = vmatprep.subr.mxu0 0.0
        %2185 = vmatpush1.msra.mxu0 0.0
        %2186 = vmatprep.subr.mxu0 0.0
        %2187 = vmatpush1.msra.mxu0 0.0
        %2188 = vmatprep.subr.mxu0 0.0
        %2189 = vmatpush1.msra.mxu0 0.0
        %2190 = vmatprep.subr.mxu0 0.0
        %2191 = vmatpush1.msra.mxu0 0.0
        %2192 = vmatprep.subr.mxu0 0.0
        %2193 = vmatpush1.msra.mxu0 0.0
        %2194 = vmatprep.subr.mxu0 0.0
        %2195 = vmatpush1.msra.mxu0 0.0
        %2196 = vmatprep.subr.mxu0 0.0
        %2197 = vmatpush1.msra.mxu0 0.0
        %2198 = vmatprep.subr.mxu0 0.0
        %2199 = vmatpush1.msra.mxu0 0.0
        %2200 = vmatprep.subr.mxu0 0.0
        %2201 = vmatpush1.msra.mxu0 0.0
        %2202 = vmatprep.subr.mxu0 0.0
        %2203 = vmatpush1.msra.mxu0 0.0
        %2204 = vmatprep.subr.mxu0 0.0
        %2205 = vmatpush1.msra.mxu0 0.0
        %2206 = vmatprep.subr.mxu0 0.0
        %2207 = vmatpush1.msra.mxu0 0.0
        %2208 = vmatprep.subr.mxu0 0.0
        %2209 = vmatpush1.msra.mxu0 0.0
        %2210 = vmatprep.subr.mxu0 0.0
        %2211 = vmatpush1.msra.mxu0 0.0
        %2212 = vmatprep.subr.mxu0 0.0
        %2213 = vmatpush1.msra.mxu0 0.0
        %2214 = vmatprep.subr.mxu0 0.0
        %2215 = vmatpush1.msra.mxu0 0.0
        %2216 = vmatprep.subr.mxu0 0.0
        %2217 = vmatpush1.msra.mxu0 0.0
        %2218 = vmatprep.subr.mxu0 0.0
        %2219 = vmatpush1.msra.mxu0 0.0
        %2220 = vmatprep.subr.mxu0 0.0
        %2221 = vmatpush1.msra.mxu0 0.0
        %2222 = vmatprep.subr.mxu0 0.0
        %2223 = vmatpush1.msra.mxu0 0.0
        %2224 = vmatprep.subr.mxu0 0.0
        %2225 = vmatpush1.msra.mxu0 0.0
        %2226 = vmatprep.subr.mxu0 0.0
        %2227 = vmatpush1.msra.mxu0 0.0
        %2228 = vmatprep.subr.mxu0 0.0
        %2229 = vmatpush1.msra.mxu0 0.0
        %2230 = vmatprep.subr.mxu0 0.0
        %2231 = vmatpush1.msra.mxu0 0.0
        %2232 = vmatprep.subr.mxu0 0.0
        %2233 = vmatpush1.msra.mxu0 0.0
        %2234 = vmatprep.subr.mxu0 0.0
        %2235 = vmatpush1.msra.mxu0 0.0
        %2236 = vmatprep.mubr.f32.mxu0 0.0
        %2237 = vmatmul.mubr.f32.gmra.mrb[0].mxu0 %v437
        %v2238 = vpop.f32.mrb[0].mxu0
        %v2239 = vadd.f32 0.0, %v2238
        %v2240 = vpop.f32.mrb[0].mxu0
        %2241 = vdwg.mxu0
        %2242 = vmatprep.subr.mxu0 0.0
        %2243 = vmatpush1.msra.mxu0 %v2074
        %2244 = vmatprep.subr.mxu0 0.0
        %2245 = vmatpush1.msra.mxu0 %v2079
        %2246 = vmatprep.subr.mxu0 0.0
        %2247 = vmatpush1.msra.mxu0 0.0
        %2248 = vmatprep.subr.mxu0 0.0
        %2249 = vmatpush1.msra.mxu0 0.0
        %2250 = vmatprep.subr.mxu0 0.0
        %2251 = vmatpush1.msra.mxu0 0.0
        %2252 = vmatprep.subr.mxu0 0.0
        %2253 = vmatpush1.msra.mxu0 0.0
        %2254 = vmatprep.subr.mxu0 0.0
        %2255 = vmatpush1.msra.mxu0 0.0
        %2256 = vmatprep.subr.mxu0 0.0
        %2257 = vmatpush1.msra.mxu0 0.0
        %2258 = vmatprep.subr.mxu0 0.0
        %2259 = vmatpush1.msra.mxu0 0.0
        %2260 = vmatprep.subr.mxu0 0.0
        %2261 = vmatpush1.msra.mxu0 0.0
        %2262 = vmatprep.subr.mxu0 0.0
        %2263 = vmatpush1.msra.mxu0 0.0
        %2264 = vmatprep.subr.mxu0 0.0
        %2265 = vmatpush1.msra.mxu0 0.0
        %2266 = vmatprep.subr.mxu0 0.0
        %2267 = vmatpush1.msra.mxu0 0.0
        %2268 = vmatprep.subr.mxu0 0.0
        %2269 = vmatpush1.msra.mxu0 0.0
        %2270 = vmatprep.subr.mxu0 0.0
        %2271 = vmatpush1.msra.mxu0 0.0
        %2272 = vmatprep.subr.mxu0 0.0
        %2273 = vmatpush1.msra.mxu0 0.0
        %2274 = vmatprep.subr.mxu0 0.0
        %2275 = vmatpush1.msra.mxu0 0.0
        %2276 = vmatprep.subr.mxu0 0.0
        %2277 = vmatpush1.msra.mxu0 0.0
        %2278 = vmatprep.subr.mxu0 0.0
        %2279 = vmatpush1.msra.mxu0 0.0
        %2280 = vmatprep.subr.mxu0 0.0
        %2281 = vmatpush1.msra.mxu0 0.0
        %2282 = vmatprep.subr.mxu0 0.0
        %2283 = vmatpush1.msra.mxu0 0.0
        %2284 = vmatprep.subr.mxu0 0.0
        %2285 = vmatpush1.msra.mxu0 0.0
        %2286 = vmatprep.subr.mxu0 0.0
        %2287 = vmatpush1.msra.mxu0 0.0
        %2288 = vmatprep.subr.mxu0 0.0
        %2289 = vmatpush1.msra.mxu0 0.0
        %2290 = vmatprep.subr.mxu0 0.0
        %2291 = vmatpush1.msra.mxu0 0.0
        %2292 = vmatprep.subr.mxu0 0.0
        %2293 = vmatpush1.msra.mxu0 0.0
        %2294 = vmatprep.subr.mxu0 0.0
        %2295 = vmatpush1.msra.mxu0 0.0
        %2296 = vmatprep.subr.mxu0 0.0
        %2297 = vmatpush1.msra.mxu0 0.0
        %2298 = vmatprep.subr.mxu0 0.0
        %2299 = vmatpush1.msra.mxu0 0.0
        %2300 = vmatprep.subr.mxu0 0.0
        %2301 = vmatpush1.msra.mxu0 0.0
        %2302 = vmatprep.subr.mxu0 0.0
        %2303 = vmatpush1.msra.mxu0 0.0
        %2304 = vmatprep.subr.mxu0 0.0
        %2305 = vmatpush1.msra.mxu0 0.0
        %2306 = vmatprep.mubr.f32.mxu0 0.0
        %2307 = vmatmul.mubr.f32.gmra.mrb[0].mxu0 %v437
        %v2308 = vpop.f32.mrb[0].mxu0
        %v2309 = vadd.f32 0.0, %v2308
        %v2310 = vpop.f32.mrb[0].mxu0
        %2311 = vdwg.mxu0
        %2312 = vmatprep.subr.mxu0 0.0
        %2313 = vmatpush1.msra.mxu0 %v2084
        %2314 = vmatprep.subr.mxu0 0.0
        %2315 = vmatpush1.msra.mxu0 %v2089
        %2316 = vmatprep.subr.mxu0 0.0
        %2317 = vmatpush1.msra.mxu0 0.0
        %2318 = vmatprep.subr.mxu0 0.0
        %2319 = vmatpush1.msra.mxu0 0.0
        %2320 = vmatprep.subr.mxu0 0.0
        %2321 = vmatpush1.msra.mxu0 0.0
        %2322 = vmatprep.subr.mxu0 0.0
        %2323 = vmatpush1.msra.mxu0 0.0
        %2324 = vmatprep.subr.mxu0 0.0
        %2325 = vmatpush1.msra.mxu0 0.0
        %2326 = vmatprep.subr.mxu0 0.0
        %2327 = vmatpush1.msra.mxu0 0.0
        %2328 = vmatprep.subr.mxu0 0.0
        %2329 = vmatpush1.msra.mxu0 0.0
        %2330 = vmatprep.subr.mxu0 0.0
        %2331 = vmatpush1.msra.mxu0 0.0
        %2332 = vmatprep.subr.mxu0 0.0
        %2333 = vmatpush1.msra.mxu0 0.0
        %2334 = vmatprep.subr.mxu0 0.0
        %2335 = vmatpush1.msra.mxu0 0.0
        %2336 = vmatprep.subr.mxu0 0.0
        %2337 = vmatpush1.msra.mxu0 0.0
        %2338 = vmatprep.subr.mxu0 0.0
        %2339 = vmatpush1.msra.mxu0 0.0
        %2340 = vmatprep.subr.mxu0 0.0
        %2341 = vmatpush1.msra.mxu0 0.0
        %2342 = vmatprep.subr.mxu0 0.0
        %2343 = vmatpush1.msra.mxu0 0.0
        %2344 = vmatprep.subr.mxu0 0.0
        %2345 = vmatpush1.msra.mxu0 0.0
        %2346 = vmatprep.subr.mxu0 0.0
        %2347 = vmatpush1.msra.mxu0 0.0
        %2348 = vmatprep.subr.mxu0 0.0
        %2349 = vmatpush1.msra.mxu0 0.0
        %2350 = vmatprep.subr.mxu0 0.0
        %2351 = vmatpush1.msra.mxu0 0.0
        %2352 = vmatprep.subr.mxu0 0.0
        %2353 = vmatpush1.msra.mxu0 0.0
        %2354 = vmatprep.subr.mxu0 0.0
        %2355 = vmatpush1.msra.mxu0 0.0
        %2356 = vmatprep.subr.mxu0 0.0
        %2357 = vmatpush1.msra.mxu0 0.0
        %2358 = vmatprep.subr.mxu0 0.0
        %2359 = vmatpush1.msra.mxu0 0.0
        %2360 = vmatprep.subr.mxu0 0.0
        %2361 = vmatpush1.msra.mxu0 0.0
        %2362 = vmatprep.subr.mxu0 0.0
        %2363 = vmatpush1.msra.mxu0 0.0
        %2364 = vmatprep.subr.mxu0 0.0
        %2365 = vmatpush1.msra.mxu0 0.0
        %2366 = vmatprep.subr.mxu0 0.0
        %2367 = vmatpush1.msra.mxu0 0.0
        %2368 = vmatprep.subr.mxu0 0.0
        %2369 = vmatpush1.msra.mxu0 0.0
        %2370 = vmatprep.subr.mxu0 0.0
        %2371 = vmatpush1.msra.mxu0 0.0
        %2372 = vmatprep.subr.mxu0 0.0
        %2373 = vmatpush1.msra.mxu0 0.0
        %2374 = vmatprep.subr.mxu0 0.0
        %2375 = vmatpush1.msra.mxu0 0.0
        %2376 = vmatprep.mubr.f32.mxu0 0.0
        %2377 = vmatmul.mubr.f32.gmra.mrb[0].mxu0 %v437
        %v2378 = vpop.f32.mrb[0].mxu0
        %v2379 = vadd.f32 0.0, %v2378
        %v2380 = vpop.f32.mrb[0].mxu0
        %2381 = vdwg.mxu0
        %2382 = vmatprep.subr.mxu0 0.0
        %2383 = vmatpush1.msra.mxu0 %v2094
        %2384 = vmatprep.subr.mxu0 0.0
        %2385 = vmatpush1.msra.mxu0 %v2099
        %2386 = vmatprep.subr.mxu0 0.0
        %2387 = vmatpush1.msra.mxu0 0.0
        %2388 = vmatprep.subr.mxu0 0.0
        %2389 = vmatpush1.msra.mxu0 0.0
        %2390 = vmatprep.subr.mxu0 0.0
        %2391 = vmatpush1.msra.mxu0 0.0
        %2392 = vmatprep.subr.mxu0 0.0
        %2393 = vmatpush1.msra.mxu0 0.0
        %2394 = vmatprep.subr.mxu0 0.0
        %2395 = vmatpush1.msra.mxu0 0.0
        %2396 = vmatprep.subr.mxu0 0.0
        %2397 = vmatpush1.msra.mxu0 0.0
        %2398 = vmatprep.subr.mxu0 0.0
        %2399 = vmatpush1.msra.mxu0 0.0
        %2400 = vmatprep.subr.mxu0 0.0
        %2401 = vmatpush1.msra.mxu0 0.0
        %2402 = vmatprep.subr.mxu0 0.0
        %2403 = vmatpush1.msra.mxu0 0.0
        %2404 = vmatprep.subr.mxu0 0.0
        %2405 = vmatpush1.msra.mxu0 0.0
        %2406 = vmatprep.subr.mxu0 0.0
        %2407 = vmatpush1.msra.mxu0 0.0
        %2408 = vmatprep.subr.mxu0 0.0
        %2409 = vmatpush1.msra.mxu0 0.0
        %2410 = vmatprep.subr.mxu0 0.0
        %2411 = vmatpush1.msra.mxu0 0.0
        %2412 = vmatprep.subr.mxu0 0.0
        %2413 = vmatpush1.msra.mxu0 0.0
        %2414 = vmatprep.subr.mxu0 0.0
        %2415 = vmatpush1.msra.mxu0 0.0
        %2416 = vmatprep.subr.mxu0 0.0
        %2417 = vmatpush1.msra.mxu0 0.0
        %2418 = vmatprep.subr.mxu0 0.0
        %2419 = vmatpush1.msra.mxu0 0.0
        %2420 = vmatprep.subr.mxu0 0.0
        %2421 = vmatpush1.msra.mxu0 0.0
        %2422 = vmatprep.subr.mxu0 0.0
        %2423 = vmatpush1.msra.mxu0 0.0
        %2424 = vmatprep.subr.mxu0 0.0
        %2425 = vmatpush1.msra.mxu0 0.0
        %2426 = vmatprep.subr.mxu0 0.0
        %2427 = vmatpush1.msra.mxu0 0.0
        %2428 = vmatprep.subr.mxu0 0.0
        %2429 = vmatpush1.msra.mxu0 0.0
        %2430 = vmatprep.subr.mxu0 0.0
        %2431 = vmatpush1.msra.mxu0 0.0
        %2432 = vmatprep.subr.mxu0 0.0
        %2433 = vmatpush1.msra.mxu0 0.0
        %2434 = vmatprep.subr.mxu0 0.0
        %2435 = vmatpush1.msra.mxu0 0.0
        %2436 = vmatprep.subr.mxu0 0.0
        %2437 = vmatpush1.msra.mxu0 0.0
        %2438 = vmatprep.subr.mxu0 0.0
        %2439 = vmatpush1.msra.mxu0 0.0
        %2440 = vmatprep.subr.mxu0 0.0
        %2441 = vmatpush1.msra.mxu0 0.0
        %2442 = vmatprep.subr.mxu0 0.0
        %2443 = vmatpush1.msra.mxu0 0.0
        %2444 = vmatprep.subr.mxu0 0.0
        %2445 = vmatpush1.msra.mxu0 0.0
        %2446 = vmatprep.mubr.f32.mxu0 0.0
        %2447 = vmatmul.mubr.f32.gmra.mrb[0].mxu0 %v437
        %v2448 = vpop.f32.mrb[0].mxu0
        %v2449 = vadd.f32 0.0, %v2448
        %v2450 = vpop.f32.mrb[0].mxu0
        %2451 = vdwg.mxu0
        %v2452 = vmul.f32 %v2169, %v2169
        %v2453 = vsub.f32 %v2309, %v2452
        %v2454 = vmul.f32 %v2239, %v2239
        %v2455 = vsub.f32 %v2379, %v2454
        %v2456 = vmul.f32 %v2169, %v2239
        %v2457 = vsub.f32 %v2449, %v2456
        %v2458 = vmul.f32 %v2169, 2.0
        %v2459 = vmul.f32 %v2458, %v2239
        %v2460 = vadd.f32 %v2459, 0.0001
        %v2461 = vmul.f32 %v2457, 2.0
        %v2462 = vadd.f32 %v2461, 0.0009
        %v2463 = vmul.f32 %v2460, %v2462
        %v2464 = vadd.f32 %v2452, %v2454
        %v2465 = vadd.f32 %v2464, 0.0001
        %v2466 = vadd.f32 %v2453, %v2455
        %v2467 = vadd.f32 %v2466, 0.0009
        %v2468 = vmul.f32 %v2465, %v2467
        %v2469 = vrcp.pop %v2468
        %v2470 = vmul.f32 %v2463, %v2469
        %v2471 = vsel %vm808, %v2470, 0.0
        %2472 = vadd.xlane.f32.xlu0 %v2471
        %v2473 = vpop.xlane.xlu0 %2472
        %v2474 = vrot.slane %v2473, 4
        %v2475 = vadd.f32 %v2473, %v2474
        %v2476 = vrot.slane %v2475, 2
        %v2477 = vadd.f32 %v2475, %v2476
        %v2478 = vrot.slane %v2477, 1
        %v2479 = vadd.f32 %v2477, %v2478
        %s2480 = vtos %v2479
        %s2481 = sadd.f32 %s1927, %s2480
        %v2482 = vstv %s1950
        %2483 = vst [vmem:[%s259] sm:$0x1] %v2482
        %v2484 = vstv %s2481
        %2485 = vst [vmem:[%s259 + $0x1] sm:$0x1] %v2484
        %p2486 = scmp.lt.s32.totalorder %s21, 1
        %s2487 = scalar_select %p2486, %s21, 1
        %s2488 = smul.addr %s2487, 2
        %s2489 = scalar_lea.vmem %s4, %s2488
        // Predicated region
        $region45: #{combined_loss.1} parent=35 // pred_check
          %p2490 = pneg %p133
        $region46: #{combined_loss.1} parent=35 // pred_check_branch
          %2492 = sbr.rel (%p2490) target = $region48
        $region47: #{combined_loss.1} parent=35 // pred_region
          _
        $region48: #{combined_loss.1} parent=35 // pred_fallthru
          _
      $region36: #{combined_loss.1} parent=5 // pred_fallthru
        _
      %p2493 = scmp.le.s32.totalorder 2, %s16
      // Predicated region
      $region49: #{combined_loss.1} parent=5 // pred_check
        %p2494 = pneg %p2493
      $region50: #{combined_loss.1} parent=5 // pred_check_branch
        %2496 = sbr.rel (%p2494) target = $region52
      $region51: #{combined_loss.1} parent=5 // pred_region
        %s2497 = ssub.s32 %s16, 2
        // Predicated region
        $region53: #{combined_loss.1} parent=51 // pred_check
          %p2498 = pneg %p139
        $region54: #{combined_loss.1} parent=51 // pred_check_branch
          %2500 = sbr.rel (%p2498) target = $region56
        $region55: #{combined_loss.1} parent=51 // pred_region
          %p2501 = scmp.lt.s32.totalorder %s22, 1
          %s2502 = scalar_select %p2501, %s22, 1
          %s2503 = smul.addr %s2502, 2
          %s2504 = scalar_lea.vmem %s4, %s2503
        $region56: #{combined_loss.1} parent=51 // pred_fallthru
          _
      $region52: #{combined_loss.1} parent=5 // pred_fallthru
        _
    $region6: #{combined_loss.1} parent=1 // loop_footer
      %s20 = sadd.s32 1, %s16
    $region7: #{combined_loss.1} parent=1 // loop_footer_branch
      %15 = sbr.rel target = $region3
    $region8: #{combined_loss.1} parent=1 // loop_exit
      _
    %2505 = vsyncpa [#allocation3], 1
    %s2506 = scalar_lea.sflag [#allocation3], 1
    %2507 = vsyncpa %s2506, 1
    %2508 = vsyncpa [#allocation5], 1
    %s2509 = scalar_lea.sflag [#allocation5], 1
    %2510 = vsyncpa %s2509, 1

</llo_original>
